<compile_context>
chip_gen: v5e
topology: v5e:2x2
jax: 0.10.0
libtpu: 0.0.40
codegen_flags: <defaults>
</compile_context>

<pallas_src>
import functools

import jax
import jax.numpy as jnp
from jax import lax
from jax.experimental import pallas as pl
from jax.experimental.pallas import tpu as pltpu


# ----------------------------------------------------------------------------
# Fused ResBlock kernel (one batch element per grid step)
# ----------------------------------------------------------------------------
def _resblock_kernel(x_ref, w1_ref, b1_ref, w2_ref, b2_ref, *rest,
                     s, Cin, Cout, Ho, Wo, use_shortcut):
    """
    x_ref   : (1, Gh, Gw, s*s*Cin)  stride-phase space-to-depth of the zero-padded input
    w1_ref  : (9, Cin, Cout)        conv1 taps, index = 3*ky + kx
    b1_ref  : (1, Cout)
    w2_ref  : (9, Cout, Cout)       conv2 taps
    b2_ref  : (1, Cout)
    wsc_ref : (Cin, Cout)           1x1 shortcut weights   (only if use_shortcut)
    bsc_ref : (1, Cout)             shortcut bias          (only if use_shortcut)
    o_ref   : (1, Ho*Wo, Cout)      output rows, row = i*Wo + j
    h1pad   : VMEM scratch (Ho+2, Wo+2, Cout) -- zero-padded conv1 output (conv2 halo)
    """
    if use_shortcut:
        wsc_ref, bsc_ref, o_ref, h1pad = rest
    else:
        o_ref, h1pad = rest

    M = Ho * Wo

    # ---- conv1: 3x3, stride s, pad 1 -- taps built in-kernel (no HBM im2col) ----------
    acc = jnp.zeros((M, Cout), jnp.float32)
    for dy in range(3):
        gy, py = dy // s, dy % s
        for dx in range(3):
            gx, px = dx // s, dx % s
            ph = py * s + px                       # stride-phase channel block
            tap = x_ref[0, gy:gy + Ho, gx:gx + Wo, ph * Cin:(ph + 1) * Cin]
            acc += jnp.dot(tap.reshape(M, Cin), w1_ref[3 * dy + dx],
                           preferred_element_type=jnp.float32)
    h1 = jnp.maximum(acc + b1_ref[...], 0.0)       # bias + ReLU, stays in VMEM

    # ---- conv2: 3x3, stride 1, pad 1, on the VMEM-resident intermediate ---------------
    h1pad[...] = jnp.zeros_like(h1pad)             # zero halo (re-done every grid step)
    h1pad[1:1 + Ho, 1:1 + Wo, :] = h1.reshape(Ho, Wo, Cout)
    acc2 = jnp.zeros((M, Cout), jnp.float32)
    for dy in range(3):
        for dx in range(3):
            tap = h1pad[dy:dy + Ho, dx:dx + Wo, :]
            acc2 += jnp.dot(tap.reshape(M, Cout), w2_ref[3 * dy + dx],
                            preferred_element_type=jnp.float32)
    out = acc2 + b2_ref[...]

    # ---- residual ----------------------------------------------------------------------
    if use_shortcut:
        # 1x1 conv, stride s: original pixels (s*i, s*j) sit at padded phase (1, 1)
        ph = 1 * s + 1
        res_in = x_ref[0, 0:Ho, 0:Wo, ph * Cin:(ph + 1) * Cin]
        res = jnp.dot(res_in.reshape(M, Cin), wsc_ref[...],
                      preferred_element_type=jnp.float32) + bsc_ref[...]
    else:
        # downsample == 1: identity residual (requires Cin == Cout, as in PyTorch)
        res = x_ref[0, 1:1 + Ho, 1:1 + Wo, 0:Cin].reshape(M, Cin)

    o_ref[0] = jnp.maximum(out + res, 0.0)         # residual add + final ReLU


# ----------------------------------------------------------------------------
# Wrapper
# ----------------------------------------------------------------------------
def resblock_forward_pallas(x_nchw, params):
    w1 = params["conv1_w"]
    B, Cin, H, W = x_nchw.shape
    Cout = int(w1.shape[0])
    s = Cout // Cin                        # == self.downsample in the PyTorch module
    Ho = (H - 1) // s + 1
    Wo = (W - 1) // s + 1

    # Single small layout op on the raw input: NCHW -> NHWC, conv zero-pad (1 per side,
    # rounded up so the padded extent divides the stride), stride-phase space-to-depth.
    x = jnp.transpose(x_nchw, (0, 2, 3, 1)).astype(jnp.float32)
    Hp = -(-(H + 2) // s) * s
    Wp = -(-(W + 2) // s) * s
    x = jnp.pad(x, ((0, 0), (1, Hp - H - 1), (1, Wp - W - 1), (0, 0)))
    Gh, Gw = Hp // s, Wp // s
    x = (x.reshape(B, Gh, s, Gw, s, Cin)
          .transpose(0, 1, 3, 2, 4, 5)
          .reshape(B, Gh, Gw, s * s * Cin))

    # PyTorch OIHW -> (ky, kx, cin, cout) -> (9, cin, cout) tap matrices (lane = cout).
    w1m = jnp.transpose(params["conv1_w"], (2, 3, 1, 0)).reshape(9, Cin, Cout)
    w2m = jnp.transpose(params["conv2_w"], (2, 3, 1, 0)).reshape(9, Cout, Cout)
    b1m = params["conv1_b"].reshape(1, Cout).astype(jnp.float32)
    b2m = params["conv2_b"].reshape(1, Cout).astype(jnp.float32)

    use_shortcut = s > 1
    args = [x, w1m.astype(jnp.float32), b1m, w2m.astype(jnp.float32), b2m]
    in_specs = [
        pl.BlockSpec((1, Gh, Gw, s * s * Cin), lambda b: (b, 0, 0, 0)),
        pl.BlockSpec((9, Cin, Cout), lambda b: (0, 0, 0)),
        pl.BlockSpec((1, Cout), lambda b: (0, 0)),
        pl.BlockSpec((9, Cout, Cout), lambda b: (0, 0, 0)),
        pl.BlockSpec((1, Cout), lambda b: (0, 0)),
    ]
    if use_shortcut:
        wscm = jnp.transpose(params["shortcut_w"], (2, 3, 1, 0)).reshape(Cin, Cout)
        bscm = params["shortcut_b"].reshape(1, Cout).astype(jnp.float32)
        args += [wscm.astype(jnp.float32), bscm]
        in_specs += [
            pl.BlockSpec((Cin, Cout), lambda b: (0, 0)),
            pl.BlockSpec((1, Cout), lambda b: (0, 0)),
        ]

    kernel = functools.partial(
        _resblock_kernel, s=s, Cin=Cin, Cout=Cout, Ho=Ho, Wo=Wo,
        use_shortcut=use_shortcut)

    out = pl.pallas_call(
        kernel,
        out_shape=jax.ShapeDtypeStruct((B, Ho * Wo, Cout), jnp.float32),
        grid=(B,),
        in_specs=in_specs,
        out_specs=pl.BlockSpec((1, Ho * Wo, Cout), lambda b: (b, 0, 0)),
        scratch_shapes=[pltpu.VMEM((Ho + 2, Wo + 2, Cout), jnp.float32)],
        compiler_params=pltpu.CompilerParams(
            dimension_semantics=("parallel",),      # batch elements -> both TCs on v7x
            vmem_limit_bytes=16 * 1024 * 1024,      # modest; safe on v7x's 64 MiB VMEM
        ),
    )(*args)

    # (B, Ho*Wo, Cout) rows -> NCHW to match the PyTorch module's output layout.
    return jnp.transpose(out.reshape(B, Ho, Wo, Cout), (0, 3, 1, 2))


# ----------------------------------------------------------------------------
# Pure-JAX reference (for correctness check)
# ----------------------------------------------------------------------------
def resblock_forward_ref(x_nchw, params):
    x = x_nchw.astype(jnp.float32)
    w1 = params["conv1_w"]
    Cin = x.shape[1]
    Cout = w1.shape[0]
    s = Cout // Cin
    dn = ("NCHW", "OIHW", "NCHW")
    out = lax.conv_general_dilated(x, w1, (s, s), [(1, 1), (1, 1)],
                                   dimension_numbers=dn,
                                   precision=lax.Precision.HIGHEST)
    out = jnp.maximum(out + params["conv1_b"][None, :, None, None], 0.0)
    out = lax.conv_general_dilated(out, params["conv2_w"], (1, 1), [(1, 1), (1, 1)],
                                   dimension_numbers=dn,
                                   precision=lax.Precision.HIGHEST)
    out = out + params["conv2_b"][None, :, None, None]
    if s > 1:
        res = lax.conv_general_dilated(x, params["shortcut_w"], (s, s),
                                       [(0, 0), (0, 0)], dimension_numbers=dn,
                                       precision=lax.Precision.HIGHEST)
        res = res + params["shortcut_b"][None, :, None, None]
    else:
        res = x
    return jnp.maximum(out + res, 0.0)


# ----------------------------------------------------------------------------
# Deterministic parameter init (shapes from the PyTorch module __init__)
# ----------------------------------------------------------------------------
def init_params(key, in_channels=4, out_channels=8):
    s = out_channels // in_channels
    ks = jax.random.split(key, 6)

    def conv_init(k, cout, cin, kh, kw):
        fan_in = cin * kh * kw
        return (jax.random.normal(k, (cout, cin, kh, kw), jnp.float32)
                / jnp.sqrt(fan_in))

    params = {
        "conv1_w": conv_init(ks[0], out_channels, in_channels, 3, 3),
        "conv1_b": jax.random.normal(ks[1], (out_channels,), jnp.float32) * 0.1,
        "conv2_w": conv_init(ks[2], out_channels, out_channels, 3, 3),
        "conv2_b": jax.random.normal(ks[3], (out_channels,), jnp.float32) * 0.1,
    }
    if s > 1:
        params["shortcut_w"] = conv_init(ks[4], out_channels, in_channels, 1, 1)
        params["shortcut_b"] = jax.random.normal(ks[5], (out_channels,),
                                                 jnp.float32) * 0.1
    return params


if __name__ == "__main__":
    key = jax.random.PRNGKey(0)
    k_p, k_x = jax.random.split(key)

    # ResBlock(in_channels=4, out_channels=8) -> downsample = 2 (shortcut path active)
    params = init_params(k_p, in_channels=4, out_channels=8)
    x = jax.random.normal(k_x, (2, 4, 16, 16), jnp.float32)

    out = resblock_forward_pallas(x, params)
    out = jax.block_until_ready(out)

    ref = resblock_forward_ref(x, params)
    assert out.shape == ref.shape == (2, 8, 8, 8), (out.shape, ref.shape)
    err = float(jnp.max(jnp.abs(out - ref)))
    scale = float(jnp.max(jnp.abs(ref))) + 1e-6
    assert err <= 1e-3 + 1e-2 * scale, (err, scale)

    print("KERNEL_OK")
</pallas_src>

<mosaic_0001>
module attributes {stable_mosaic.version = 11 : i64} {
  func.func @_resblock_kernel(%arg0: i32, %arg1: memref<1x9x9x16xf32, #tpu.memory_space<vmem>>, %arg2: memref<9x4x8xf32, #tpu.memory_space<vmem>>, %arg3: memref<1x8xf32, #tpu.memory_space<vmem>>, %arg4: memref<9x8x8xf32, #tpu.memory_space<vmem>>, %arg5: memref<1x8xf32, #tpu.memory_space<vmem>>, %arg6: memref<4x8xf32, #tpu.memory_space<vmem>>, %arg7: memref<1x8xf32, #tpu.memory_space<vmem>>, %arg8: memref<1x64x8xf32, #tpu.memory_space<vmem>>, %arg9: memref<10x10x8xf32, #tpu.memory_space<vmem>>) attributes {dimension_semantics = [#tpu.dimension_semantics<parallel>], iteration_bounds = array<i64: 2>, scalar_prefetch = 0 : i64, scratch_operands = 1 : i64, tpu.core_type = #tpu.core_type<tc>, window_params = [{transform_indices = @transform_0, window_bounds = array<i64: 1, 9, 9, 16>}, {pipeline_mode = #tpu.pipeline_mode<synchronous>, transform_indices = @transform_1, window_bounds = array<i64: 9, 4, 8>}, {pipeline_mode = #tpu.pipeline_mode<synchronous>, transform_indices = @transform_2, window_bounds = array<i64: 1, 8>}, {pipeline_mode = #tpu.pipeline_mode<synchronous>, transform_indices = @transform_3, window_bounds = array<i64: 9, 8, 8>}, {pipeline_mode = #tpu.pipeline_mode<synchronous>, transform_indices = @transform_4, window_bounds = array<i64: 1, 8>}, {pipeline_mode = #tpu.pipeline_mode<synchronous>, transform_indices = @transform_5, window_bounds = array<i64: 4, 8>}, {pipeline_mode = #tpu.pipeline_mode<synchronous>, transform_indices = @transform_6, window_bounds = array<i64: 1, 8>}, {transform_indices = @transform_7, window_bounds = array<i64: 1, 64, 8>}]} {
    %cst = arith.constant 0.000000e+00 : f32
    %0 = vector.broadcast %cst : f32 to vector<64x8xf32>
    %c0 = arith.constant 0 : index
    %c0_0 = arith.constant 0 : index
    %c0_1 = arith.constant 0 : index
    %c0_2 = arith.constant 0 : index
    %1 = vector.load %arg1[%c0, %c0_0, %c0_1, %c0_2] : memref<1x9x9x16xf32, #tpu.memory_space<vmem>>, vector<1x8x8x4xf32>
    %2 = vector.shape_cast %1 : vector<1x8x8x4xf32> to vector<8x8x4xf32>
    %3 = vector.shape_cast %2 : vector<8x8x4xf32> to vector<64x4xf32>
    %c0_3 = arith.constant 0 : index
    %c0_4 = arith.constant 0 : index
    %c0_5 = arith.constant 0 : index
    %4 = vector.load %arg2[%c0_3, %c0_4, %c0_5] : memref<9x4x8xf32, #tpu.memory_space<vmem>>, vector<1x4x8xf32>
    %5 = vector.shape_cast %4 : vector<1x4x8xf32> to vector<4x8xf32>
    %cst_6 = arith.constant dense<0.000000e+00> : vector<64x8xf32>
    %6 = tpu.matmul %3, %5, %cst_6 {dimension_numbers = #tpu.dot_dimension_numbers<[1], [0], [0], [1], [0, 0, 1, 1], [], []>} : vector<64x4xf32>, vector<4x8xf32>, vector<64x8xf32> -> vector<64x8xf32>
    %7 = arith.addf %0, %6 : vector<64x8xf32>
    %c0_7 = arith.constant 0 : index
    %c0_8 = arith.constant 0 : index
    %c0_9 = arith.constant 0 : index
    %c4 = arith.constant 4 : index
    %8 = vector.load %arg1[%c0_7, %c0_8, %c0_9, %c4] : memref<1x9x9x16xf32, #tpu.memory_space<vmem>>, vector<1x8x8x4xf32>
    %9 = vector.shape_cast %8 : vector<1x8x8x4xf32> to vector<8x8x4xf32>
    %10 = vector.shape_cast %9 : vector<8x8x4xf32> to vector<64x4xf32>
    %c1 = arith.constant 1 : index
    %c0_10 = arith.constant 0 : index
    %c0_11 = arith.constant 0 : index
    %11 = vector.load %arg2[%c1, %c0_10, %c0_11] : memref<9x4x8xf32, #tpu.memory_space<vmem>>, vector<1x4x8xf32>
    %12 = vector.shape_cast %11 : vector<1x4x8xf32> to vector<4x8xf32>
    %cst_12 = arith.constant dense<0.000000e+00> : vector<64x8xf32>
    %13 = tpu.matmul %10, %12, %cst_12 {dimension_numbers = #tpu.dot_dimension_numbers<[1], [0], [0], [1], [0, 0, 1, 1], [], []>} : vector<64x4xf32>, vector<4x8xf32>, vector<64x8xf32> -> vector<64x8xf32>
    %14 = arith.addf %7, %13 : vector<64x8xf32>
    %c0_13 = arith.constant 0 : index
    %c0_14 = arith.constant 0 : index
    %c1_15 = arith.constant 1 : index
    %c0_16 = arith.constant 0 : index
    %15 = vector.load %arg1[%c0_13, %c0_14, %c1_15, %c0_16] : memref<1x9x9x16xf32, #tpu.memory_space<vmem>>, vector<1x8x8x4xf32>
    %16 = vector.shape_cast %15 : vector<1x8x8x4xf32> to vector<8x8x4xf32>
    %17 = vector.shape_cast %16 : vector<8x8x4xf32> to vector<64x4xf32>
    %c2 = arith.constant 2 : index
    %c0_17 = arith.constant 0 : index
    %c0_18 = arith.constant 0 : index
    %18 = vector.load %arg2[%c2, %c0_17, %c0_18] : memref<9x4x8xf32, #tpu.memory_space<vmem>>, vector<1x4x8xf32>
    %19 = vector.shape_cast %18 : vector<1x4x8xf32> to vector<4x8xf32>
    %cst_19 = arith.constant dense<0.000000e+00> : vector<64x8xf32>
    %20 = tpu.matmul %17, %19, %cst_19 {dimension_numbers = #tpu.dot_dimension_numbers<[1], [0], [0], [1], [0, 0, 1, 1], [], []>} : vector<64x4xf32>, vector<4x8xf32>, vector<64x8xf32> -> vector<64x8xf32>
    %21 = arith.addf %14, %20 : vector<64x8xf32>
    %c0_20 = arith.constant 0 : index
    %c0_21 = arith.constant 0 : index
    %c0_22 = arith.constant 0 : index
    %c8 = arith.constant 8 : index
    %22 = vector.load %arg1[%c0_20, %c0_21, %c0_22, %c8] : memref<1x9x9x16xf32, #tpu.memory_space<vmem>>, vector<1x8x8x4xf32>
    %23 = vector.shape_cast %22 : vector<1x8x8x4xf32> to vector<8x8x4xf32>
    %24 = vector.shape_cast %23 : vector<8x8x4xf32> to vector<64x4xf32>
    %c3 = arith.constant 3 : index
    %c0_23 = arith.constant 0 : index
    %c0_24 = arith.constant 0 : index
    %25 = vector.load %arg2[%c3, %c0_23, %c0_24] : memref<9x4x8xf32, #tpu.memory_space<vmem>>, vector<1x4x8xf32>
    %26 = vector.shape_cast %25 : vector<1x4x8xf32> to vector<4x8xf32>
    %cst_25 = arith.constant dense<0.000000e+00> : vector<64x8xf32>
    %27 = tpu.matmul %24, %26, %cst_25 {dimension_numbers = #tpu.dot_dimension_numbers<[1], [0], [0], [1], [0, 0, 1, 1], [], []>} : vector<64x4xf32>, vector<4x8xf32>, vector<64x8xf32> -> vector<64x8xf32>
    %28 = arith.addf %21, %27 : vector<64x8xf32>
    %c0_26 = arith.constant 0 : index
    %c0_27 = arith.constant 0 : index
    %c0_28 = arith.constant 0 : index
    %c12 = arith.constant 12 : index
    %29 = vector.load %arg1[%c0_26, %c0_27, %c0_28, %c12] : memref<1x9x9x16xf32, #tpu.memory_space<vmem>>, vector<1x8x8x4xf32>
    %30 = vector.shape_cast %29 : vector<1x8x8x4xf32> to vector<8x8x4xf32>
    %31 = vector.shape_cast %30 : vector<8x8x4xf32> to vector<64x4xf32>
    %c4_29 = arith.constant 4 : index
    %c0_30 = arith.constant 0 : index
    %c0_31 = arith.constant 0 : index
    %32 = vector.load %arg2[%c4_29, %c0_30, %c0_31] : memref<9x4x8xf32, #tpu.memory_space<vmem>>, vector<1x4x8xf32>
    %33 = vector.shape_cast %32 : vector<1x4x8xf32> to vector<4x8xf32>
    %cst_32 = arith.constant dense<0.000000e+00> : vector<64x8xf32>
    %34 = tpu.matmul %31, %33, %cst_32 {dimension_numbers = #tpu.dot_dimension_numbers<[1], [0], [0], [1], [0, 0, 1, 1], [], []>} : vector<64x4xf32>, vector<4x8xf32>, vector<64x8xf32> -> vector<64x8xf32>
    %35 = arith.addf %28, %34 : vector<64x8xf32>
    %c0_33 = arith.constant 0 : index
    %c0_34 = arith.constant 0 : index
    %c1_35 = arith.constant 1 : index
    %c8_36 = arith.constant 8 : index
    %36 = vector.load %arg1[%c0_33, %c0_34, %c1_35, %c8_36] : memref<1x9x9x16xf32, #tpu.memory_space<vmem>>, vector<1x8x8x4xf32>
    %37 = vector.shape_cast %36 : vector<1x8x8x4xf32> to vector<8x8x4xf32>
    %38 = vector.shape_cast %37 : vector<8x8x4xf32> to vector<64x4xf32>
    %c5 = arith.constant 5 : index
    %c0_37 = arith.constant 0 : index
    %c0_38 = arith.constant 0 : index
    %39 = vector.load %arg2[%c5, %c0_37, %c0_38] : memref<9x4x8xf32, #tpu.memory_space<vmem>>, vector<1x4x8xf32>
    %40 = vector.shape_cast %39 : vector<1x4x8xf32> to vector<4x8xf32>
    %cst_39 = arith.constant dense<0.000000e+00> : vector<64x8xf32>
    %41 = tpu.matmul %38, %40, %cst_39 {dimension_numbers = #tpu.dot_dimension_numbers<[1], [0], [0], [1], [0, 0, 1, 1], [], []>} : vector<64x4xf32>, vector<4x8xf32>, vector<64x8xf32> -> vector<64x8xf32>
    %42 = arith.addf %35, %41 : vector<64x8xf32>
    %c0_40 = arith.constant 0 : index
    %c1_41 = arith.constant 1 : index
    %c0_42 = arith.constant 0 : index
    %c0_43 = arith.constant 0 : index
    %43 = vector.load %arg1[%c0_40, %c1_41, %c0_42, %c0_43] : memref<1x9x9x16xf32, #tpu.memory_space<vmem>>, vector<1x8x8x4xf32>
    %44 = vector.shape_cast %43 : vector<1x8x8x4xf32> to vector<8x8x4xf32>
    %45 = vector.shape_cast %44 : vector<8x8x4xf32> to vector<64x4xf32>
    %c6 = arith.constant 6 : index
    %c0_44 = arith.constant 0 : index
    %c0_45 = arith.constant 0 : index
    %46 = vector.load %arg2[%c6, %c0_44, %c0_45] : memref<9x4x8xf32, #tpu.memory_space<vmem>>, vector<1x4x8xf32>
    %47 = vector.shape_cast %46 : vector<1x4x8xf32> to vector<4x8xf32>
    %cst_46 = arith.constant dense<0.000000e+00> : vector<64x8xf32>
    %48 = tpu.matmul %45, %47, %cst_46 {dimension_numbers = #tpu.dot_dimension_numbers<[1], [0], [0], [1], [0, 0, 1, 1], [], []>} : vector<64x4xf32>, vector<4x8xf32>, vector<64x8xf32> -> vector<64x8xf32>
    %49 = arith.addf %42, %48 : vector<64x8xf32>
    %c0_47 = arith.constant 0 : index
    %c1_48 = arith.constant 1 : index
    %c0_49 = arith.constant 0 : index
    %c4_50 = arith.constant 4 : index
    %50 = vector.load %arg1[%c0_47, %c1_48, %c0_49, %c4_50] : memref<1x9x9x16xf32, #tpu.memory_space<vmem>>, vector<1x8x8x4xf32>
    %51 = vector.shape_cast %50 : vector<1x8x8x4xf32> to vector<8x8x4xf32>
    %52 = vector.shape_cast %51 : vector<8x8x4xf32> to vector<64x4xf32>
    %c7 = arith.constant 7 : index
    %c0_51 = arith.constant 0 : index
    %c0_52 = arith.constant 0 : index
    %53 = vector.load %arg2[%c7, %c0_51, %c0_52] : memref<9x4x8xf32, #tpu.memory_space<vmem>>, vector<1x4x8xf32>
    %54 = vector.shape_cast %53 : vector<1x4x8xf32> to vector<4x8xf32>
    %cst_53 = arith.constant dense<0.000000e+00> : vector<64x8xf32>
    %55 = tpu.matmul %52, %54, %cst_53 {dimension_numbers = #tpu.dot_dimension_numbers<[1], [0], [0], [1], [0, 0, 1, 1], [], []>} : vector<64x4xf32>, vector<4x8xf32>, vector<64x8xf32> -> vector<64x8xf32>
    %56 = arith.addf %49, %55 : vector<64x8xf32>
    %c0_54 = arith.constant 0 : index
    %c1_55 = arith.constant 1 : index
    %c1_56 = arith.constant 1 : index
    %c0_57 = arith.constant 0 : index
    %57 = vector.load %arg1[%c0_54, %c1_55, %c1_56, %c0_57] : memref<1x9x9x16xf32, #tpu.memory_space<vmem>>, vector<1x8x8x4xf32>
    %58 = vector.shape_cast %57 : vector<1x8x8x4xf32> to vector<8x8x4xf32>
    %59 = vector.shape_cast %58 : vector<8x8x4xf32> to vector<64x4xf32>
    %c8_58 = arith.constant 8 : index
    %c0_59 = arith.constant 0 : index
    %c0_60 = arith.constant 0 : index
    %60 = vector.load %arg2[%c8_58, %c0_59, %c0_60] : memref<9x4x8xf32, #tpu.memory_space<vmem>>, vector<1x4x8xf32>
    %61 = vector.shape_cast %60 : vector<1x4x8xf32> to vector<4x8xf32>
    %cst_61 = arith.constant dense<0.000000e+00> : vector<64x8xf32>
    %62 = tpu.matmul %59, %61, %cst_61 {dimension_numbers = #tpu.dot_dimension_numbers<[1], [0], [0], [1], [0, 0, 1, 1], [], []>} : vector<64x4xf32>, vector<4x8xf32>, vector<64x8xf32> -> vector<64x8xf32>
    %63 = arith.addf %56, %62 : vector<64x8xf32>
    %c0_62 = arith.constant 0 : index
    %c0_63 = arith.constant 0 : index
    %64 = vector.load %arg3[%c0_62, %c0_63] : memref<1x8xf32, #tpu.memory_space<vmem>>, vector<1x8xf32>
    %65 = vector.broadcast %64 : vector<1x8xf32> to vector<64x8xf32>
    %66 = arith.addf %63, %65 : vector<64x8xf32>
    %cst_64 = arith.constant 0.000000e+00 : f32
    %67 = vector.broadcast %cst_64 : f32 to vector<64x8xf32>
    %68 = arith.maximumf %66, %67 : vector<64x8xf32>
    %cst_65 = arith.constant 0.000000e+00 : f32
    %69 = vector.broadcast %cst_65 : f32 to vector<10x10x8xf32>
    %c0_66 = arith.constant 0 : index
    %c0_67 = arith.constant 0 : index
    %c0_68 = arith.constant 0 : index
    %70 = vector.load %arg9[%c0_66, %c0_67, %c0_68] : memref<10x10x8xf32, #tpu.memory_space<vmem>>, vector<10x10x8xf32>
    tpu.vector_store %arg9[%c0_66, %c0_67, %c0_68], %69 {strides = array<i32>} : memref<10x10x8xf32, #tpu.memory_space<vmem>>, vector<10x10x8xf32>,
    %71 = vector.shape_cast %68 : vector<64x8xf32> to vector<8x8x8xf32>
    %c1_69 = arith.constant 1 : index
    %c1_70 = arith.constant 1 : index
    %c0_71 = arith.constant 0 : index
    %72 = vector.load %arg9[%c1_69, %c1_70, %c0_71] : memref<10x10x8xf32, #tpu.memory_space<vmem>>, vector<8x8x8xf32>
    tpu.vector_store %arg9[%c1_69, %c1_70, %c0_71], %71 {strides = array<i32>} : memref<10x10x8xf32, #tpu.memory_space<vmem>>, vector<8x8x8xf32>,
    %cst_72 = arith.constant 0.000000e+00 : f32
    %73 = vector.broadcast %cst_72 : f32 to vector<64x8xf32>
    %c0_73 = arith.constant 0 : index
    %c0_74 = arith.constant 0 : index
    %c0_75 = arith.constant 0 : index
    %74 = vector.load %arg9[%c0_73, %c0_74, %c0_75] : memref<10x10x8xf32, #tpu.memory_space<vmem>>, vector<8x8x8xf32>
    %75 = vector.shape_cast %74 : vector<8x8x8xf32> to vector<64x8xf32>
    %c0_76 = arith.constant 0 : index
    %c0_77 = arith.constant 0 : index
    %c0_78 = arith.constant 0 : index
    %76 = vector.load %arg4[%c0_76, %c0_77, %c0_78] : memref<9x8x8xf32, #tpu.memory_space<vmem>>, vector<1x8x8xf32>
    %77 = vector.shape_cast %76 : vector<1x8x8xf32> to vector<8x8xf32>
    %cst_79 = arith.constant dense<0.000000e+00> : vector<64x8xf32>
    %78 = tpu.matmul %75, %77, %cst_79 {dimension_numbers = #tpu.dot_dimension_numbers<[1], [0], [0], [1], [0, 0, 1, 1], [], []>} : vector<64x8xf32>, vector<8x8xf32>, vector<64x8xf32> -> vector<64x8xf32>
    %79 = arith.addf %73, %78 : vector<64x8xf32>
    %c0_80 = arith.constant 0 : index
    %c1_81 = arith.constant 1 : index
    %c0_82 = arith.constant 0 : index
    %80 = vector.load %arg9[%c0_80, %c1_81, %c0_82] : memref<10x10x8xf32, #tpu.memory_space<vmem>>, vector<8x8x8xf32>
    %81 = vector.shape_cast %80 : vector<8x8x8xf32> to vector<64x8xf32>
    %c1_83 = arith.constant 1 : index
    %c0_84 = arith.constant 0 : index
    %c0_85 = arith.constant 0 : index
    %82 = vector.load %arg4[%c1_83, %c0_84, %c0_85] : memref<9x8x8xf32, #tpu.memory_space<vmem>>, vector<1x8x8xf32>
    %83 = vector.shape_cast %82 : vector<1x8x8xf32> to vector<8x8xf32>
    %cst_86 = arith.constant dense<0.000000e+00> : vector<64x8xf32>
    %84 = tpu.matmul %81, %83, %cst_86 {dimension_numbers = #tpu.dot_dimension_numbers<[1], [0], [0], [1], [0, 0, 1, 1], [], []>} : vector<64x8xf32>, vector<8x8xf32>, vector<64x8xf32> -> vector<64x8xf32>
    %85 = arith.addf %79, %84 : vector<64x8xf32>
    %c0_87 = arith.constant 0 : index
    %c2_88 = arith.constant 2 : index
    %c0_89 = arith.constant 0 : index
    %86 = vector.load %arg9[%c0_87, %c2_88, %c0_89] : memref<10x10x8xf32, #tpu.memory_space<vmem>>, vector<8x8x8xf32>
    %87 = vector.shape_cast %86 : vector<8x8x8xf32> to vector<64x8xf32>
    %c2_90 = arith.constant 2 : index
    %c0_91 = arith.constant 0 : index
    %c0_92 = arith.constant 0 : index
    %88 = vector.load %arg4[%c2_90, %c0_91, %c0_92] : memref<9x8x8xf32, #tpu.memory_space<vmem>>, vector<1x8x8xf32>
    %89 = vector.shape_cast %88 : vector<1x8x8xf32> to vector<8x8xf32>
    %cst_93 = arith.constant dense<0.000000e+00> : vector<64x8xf32>
    %90 = tpu.matmul %87, %89, %cst_93 {dimension_numbers = #tpu.dot_dimension_numbers<[1], [0], [0], [1], [0, 0, 1, 1], [], []>} : vector<64x8xf32>, vector<8x8xf32>, vector<64x8xf32> -> vector<64x8xf32>
    %91 = arith.addf %85, %90 : vector<64x8xf32>
    %c1_94 = arith.constant 1 : index
    %c0_95 = arith.constant 0 : index
    %c0_96 = arith.constant 0 : index
    %92 = vector.load %arg9[%c1_94, %c0_95, %c0_96] : memref<10x10x8xf32, #tpu.memory_space<vmem>>, vector<8x8x8xf32>
    %93 = vector.shape_cast %92 : vector<8x8x8xf32> to vector<64x8xf32>
    %c3_97 = arith.constant 3 : index
    %c0_98 = arith.constant 0 : index
    %c0_99 = arith.constant 0 : index
    %94 = vector.load %arg4[%c3_97, %c0_98, %c0_99] : memref<9x8x8xf32, #tpu.memory_space<vmem>>, vector<1x8x8xf32>
    %95 = vector.shape_cast %94 : vector<1x8x8xf32> to vector<8x8xf32>
    %cst_100 = arith.constant dense<0.000000e+00> : vector<64x8xf32>
    %96 = tpu.matmul %93, %95, %cst_100 {dimension_numbers = #tpu.dot_dimension_numbers<[1], [0], [0], [1], [0, 0, 1, 1], [], []>} : vector<64x8xf32>, vector<8x8xf32>, vector<64x8xf32> -> vector<64x8xf32>
    %97 = arith.addf %91, %96 : vector<64x8xf32>
    %c1_101 = arith.constant 1 : index
    %c1_102 = arith.constant 1 : index
    %c0_103 = arith.constant 0 : index
    %98 = vector.load %arg9[%c1_101, %c1_102, %c0_103] : memref<10x10x8xf32, #tpu.memory_space<vmem>>, vector<8x8x8xf32>
    %99 = vector.shape_cast %98 : vector<8x8x8xf32> to vector<64x8xf32>
    %c4_104 = arith.constant 4 : index
    %c0_105 = arith.constant 0 : index
    %c0_106 = arith.constant 0 : index
    %100 = vector.load %arg4[%c4_104, %c0_105, %c0_106] : memref<9x8x8xf32, #tpu.memory_space<vmem>>, vector<1x8x8xf32>
    %101 = vector.shape_cast %100 : vector<1x8x8xf32> to vector<8x8xf32>
    %cst_107 = arith.constant dense<0.000000e+00> : vector<64x8xf32>
    %102 = tpu.matmul %99, %101, %cst_107 {dimension_numbers = #tpu.dot_dimension_numbers<[1], [0], [0], [1], [0, 0, 1, 1], [], []>} : vector<64x8xf32>, vector<8x8xf32>, vector<64x8xf32> -> vector<64x8xf32>
    %103 = arith.addf %97, %102 : vector<64x8xf32>
    %c1_108 = arith.constant 1 : index
    %c2_109 = arith.constant 2 : index
    %c0_110 = arith.constant 0 : index
    %104 = vector.load %arg9[%c1_108, %c2_109, %c0_110] : memref<10x10x8xf32, #tpu.memory_space<vmem>>, vector<8x8x8xf32>
    %105 = vector.shape_cast %104 : vector<8x8x8xf32> to vector<64x8xf32>
    %c5_111 = arith.constant 5 : index
    %c0_112 = arith.constant 0 : index
    %c0_113 = arith.constant 0 : index
    %106 = vector.load %arg4[%c5_111, %c0_112, %c0_113] : memref<9x8x8xf32, #tpu.memory_space<vmem>>, vector<1x8x8xf32>
    %107 = vector.shape_cast %106 : vector<1x8x8xf32> to vector<8x8xf32>
    %cst_114 = arith.constant dense<0.000000e+00> : vector<64x8xf32>
    %108 = tpu.matmul %105, %107, %cst_114 {dimension_numbers = #tpu.dot_dimension_numbers<[1], [0], [0], [1], [0, 0, 1, 1], [], []>} : vector<64x8xf32>, vector<8x8xf32>, vector<64x8xf32> -> vector<64x8xf32>
    %109 = arith.addf %103, %108 : vector<64x8xf32>
    %c2_115 = arith.constant 2 : index
    %c0_116 = arith.constant 0 : index
    %c0_117 = arith.constant 0 : index
    %110 = vector.load %arg9[%c2_115, %c0_116, %c0_117] : memref<10x10x8xf32, #tpu.memory_space<vmem>>, vector<8x8x8xf32>
    %111 = vector.shape_cast %110 : vector<8x8x8xf32> to vector<64x8xf32>
    %c6_118 = arith.constant 6 : index
    %c0_119 = arith.constant 0 : index
    %c0_120 = arith.constant 0 : index
    %112 = vector.load %arg4[%c6_118, %c0_119, %c0_120] : memref<9x8x8xf32, #tpu.memory_space<vmem>>, vector<1x8x8xf32>
    %113 = vector.shape_cast %112 : vector<1x8x8xf32> to vector<8x8xf32>
    %cst_121 = arith.constant dense<0.000000e+00> : vector<64x8xf32>
    %114 = tpu.matmul %111, %113, %cst_121 {dimension_numbers = #tpu.dot_dimension_numbers<[1], [0], [0], [1], [0, 0, 1, 1], [], []>} : vector<64x8xf32>, vector<8x8xf32>, vector<64x8xf32> -> vector<64x8xf32>
    %115 = arith.addf %109, %114 : vector<64x8xf32>
    %c2_122 = arith.constant 2 : index
    %c1_123 = arith.constant 1 : index
    %c0_124 = arith.constant 0 : index
    %116 = vector.load %arg9[%c2_122, %c1_123, %c0_124] : memref<10x10x8xf32, #tpu.memory_space<vmem>>, vector<8x8x8xf32>
    %117 = vector.shape_cast %116 : vector<8x8x8xf32> to vector<64x8xf32>
    %c7_125 = arith.constant 7 : index
    %c0_126 = arith.constant 0 : index
    %c0_127 = arith.constant 0 : index
    %118 = vector.load %arg4[%c7_125, %c0_126, %c0_127] : memref<9x8x8xf32, #tpu.memory_space<vmem>>, vector<1x8x8xf32>
    %119 = vector.shape_cast %118 : vector<1x8x8xf32> to vector<8x8xf32>
    %cst_128 = arith.constant dense<0.000000e+00> : vector<64x8xf32>
    %120 = tpu.matmul %117, %119, %cst_128 {dimension_numbers = #tpu.dot_dimension_numbers<[1], [0], [0], [1], [0, 0, 1, 1], [], []>} : vector<64x8xf32>, vector<8x8xf32>, vector<64x8xf32> -> vector<64x8xf32>
    %121 = arith.addf %115, %120 : vector<64x8xf32>
    %c2_129 = arith.constant 2 : index
    %c2_130 = arith.constant 2 : index
    %c0_131 = arith.constant 0 : index
    %122 = vector.load %arg9[%c2_129, %c2_130, %c0_131] : memref<10x10x8xf32, #tpu.memory_space<vmem>>, vector<8x8x8xf32>
    %123 = vector.shape_cast %122 : vector<8x8x8xf32> to vector<64x8xf32>
    %c8_132 = arith.constant 8 : index
    %c0_133 = arith.constant 0 : index
    %c0_134 = arith.constant 0 : index
    %124 = vector.load %arg4[%c8_132, %c0_133, %c0_134] : memref<9x8x8xf32, #tpu.memory_space<vmem>>, vector<1x8x8xf32>
    %125 = vector.shape_cast %124 : vector<1x8x8xf32> to vector<8x8xf32>
    %cst_135 = arith.constant dense<0.000000e+00> : vector<64x8xf32>
    %126 = tpu.matmul %123, %125, %cst_135 {dimension_numbers = #tpu.dot_dimension_numbers<[1], [0], [0], [1], [0, 0, 1, 1], [], []>} : vector<64x8xf32>, vector<8x8xf32>, vector<64x8xf32> -> vector<64x8xf32>
    %127 = arith.addf %121, %126 : vector<64x8xf32>
    %c0_136 = arith.constant 0 : index
    %c0_137 = arith.constant 0 : index
    %128 = vector.load %arg5[%c0_136, %c0_137] : memref<1x8xf32, #tpu.memory_space<vmem>>, vector<1x8xf32>
    %129 = vector.broadcast %128 : vector<1x8xf32> to vector<64x8xf32>
    %130 = arith.addf %127, %129 : vector<64x8xf32>
    %c0_138 = arith.constant 0 : index
    %c0_139 = arith.constant 0 : index
    %c0_140 = arith.constant 0 : index
    %c12_141 = arith.constant 12 : index
    %131 = vector.load %arg1[%c0_138, %c0_139, %c0_140, %c12_141] : memref<1x9x9x16xf32, #tpu.memory_space<vmem>>, vector<1x8x8x4xf32>
    %132 = vector.shape_cast %131 : vector<1x8x8x4xf32> to vector<8x8x4xf32>
    %133 = vector.shape_cast %132 : vector<8x8x4xf32> to vector<64x4xf32>
    %c0_142 = arith.constant 0 : index
    %c0_143 = arith.constant 0 : index
    %134 = vector.load %arg6[%c0_142, %c0_143] : memref<4x8xf32, #tpu.memory_space<vmem>>, vector<4x8xf32>
    %cst_144 = arith.constant dense<0.000000e+00> : vector<64x8xf32>
    %135 = tpu.matmul %133, %134, %cst_144 {dimension_numbers = #tpu.dot_dimension_numbers<[1], [0], [0], [1], [0, 0, 1, 1], [], []>} : vector<64x4xf32>, vector<4x8xf32>, vector<64x8xf32> -> vector<64x8xf32>
    %c0_145 = arith.constant 0 : index
    %c0_146 = arith.constant 0 : index
    %136 = vector.load %arg7[%c0_145, %c0_146] : memref<1x8xf32, #tpu.memory_space<vmem>>, vector<1x8xf32>
    %137 = vector.broadcast %136 : vector<1x8xf32> to vector<64x8xf32>
    %138 = arith.addf %135, %137 : vector<64x8xf32>
    %139 = arith.addf %130, %138 : vector<64x8xf32>
    %cst_147 = arith.constant 0.000000e+00 : f32
    %140 = vector.broadcast %cst_147 : f32 to vector<64x8xf32>
    %141 = arith.maximumf %139, %140 : vector<64x8xf32>
    %c0_148 = arith.constant 0 : index
    %c0_149 = arith.constant 0 : index
    %c0_150 = arith.constant 0 : index
    %142 = vector.load %arg8[%c0_148, %c0_149, %c0_150] : memref<1x64x8xf32, #tpu.memory_space<vmem>>, vector<1x64x8xf32>
    %143 = vector.shape_cast %142 : vector<1x64x8xf32> to vector<64x8xf32>
    %144 = vector.shape_cast %141 : vector<64x8xf32> to vector<1x64x8xf32>
    tpu.vector_store %arg8[%c0_148, %c0_149, %c0_150], %144 {strides = array<i32>} : memref<1x64x8xf32, #tpu.memory_space<vmem>>, vector<1x64x8xf32>,
    return
  }
  func.func @transform_0(%arg0: i32) -> (i32, i32, i32, i32) {
    %c0_i32 = arith.constant 0 : i32
    %c0_i32_0 = arith.constant 0 : i32
    %c0_i32_1 = arith.constant 0 : i32
    %c0_i32_2 = arith.constant 0 : i32
    return %arg0, %c0_i32, %c0_i32_0, %c0_i32_1 : i32, i32, i32, i32
  }
  func.func @transform_1(%arg0: i32) -> (i32, i32, i32) {
    %c0_i32 = arith.constant 0 : i32
    %c0_i32_0 = arith.constant 0 : i32
    %c0_i32_1 = arith.constant 0 : i32
    %c0_i32_2 = arith.constant 0 : i32
    return %c0_i32, %c0_i32_0, %c0_i32_1 : i32, i32, i32
  }
  func.func @transform_2(%arg0: i32) -> (i32, i32) {
    %c0_i32 = arith.constant 0 : i32
    %c0_i32_0 = arith.constant 0 : i32
    %c0_i32_1 = arith.constant 0 : i32
    return %c0_i32, %c0_i32_0 : i32, i32
  }
  func.func @transform_3(%arg0: i32) -> (i32, i32, i32) {
    %c0_i32 = arith.constant 0 : i32
    %c0_i32_0 = arith.constant 0 : i32
    %c0_i32_1 = arith.constant 0 : i32
    %c0_i32_2 = arith.constant 0 : i32
    return %c0_i32, %c0_i32_0, %c0_i32_1 : i32, i32, i32
  }
  func.func @transform_4(%arg0: i32) -> (i32, i32) {
    %c0_i32 = arith.constant 0 : i32
    %c0_i32_0 = arith.constant 0 : i32
    %c0_i32_1 = arith.constant 0 : i32
    return %c0_i32, %c0_i32_0 : i32, i32
  }
  func.func @transform_5(%arg0: i32) -> (i32, i32) {
    %c0_i32 = arith.constant 0 : i32
    %c0_i32_0 = arith.constant 0 : i32
    %c0_i32_1 = arith.constant 0 : i32
    return %c0_i32, %c0_i32_0 : i32, i32
  }
  func.func @transform_6(%arg0: i32) -> (i32, i32) {
    %c0_i32 = arith.constant 0 : i32
    %c0_i32_0 = arith.constant 0 : i32
    %c0_i32_1 = arith.constant 0 : i32
    return %c0_i32, %c0_i32_0 : i32, i32
  }
  func.func @transform_7(%arg0: i32) -> (i32, i32, i32) {
    %c0_i32 = arith.constant 0 : i32
    %c0_i32_0 = arith.constant 0 : i32
    %c0_i32_1 = arith.constant 0 : i32
    return %arg0, %c0_i32, %c0_i32_0 : i32, i32, i32
  }
}

</mosaic_0001>

<llo_original>
// kernel: tpu_custom_call.1
$region0: #{tpu_custom_call.1}
  #allocation0 [shape = 'u32[]', space=smem, size = 0x4, offset = 0x4, fixed_abs, tag = 'smem constant byte address 0x4 - core index']
  #allocation1 [shape = 'u32[72,128]{1,0:T(1,128)}', space=vmem, size = 0x9000, scoped, tag = 'internal scratch']
  #allocation2 [shape = 'f32[10,10,8]{2,1,0:T(8,128)}', space=vmem, size = 0x14000, scoped, tag = 'scratch operand']
  %s0 = inlined_call_operand.vmem [shape: f32[2,9,9,16], index: 0, kind: input, shape index: {}]
  %s1 = inlined_call_operand.vmem [shape: f32[9,4,8], index: 1, kind: input, shape index: {}]
  %s2 = inlined_call_operand.vmem [shape: f32[1,8], index: 2, kind: input, shape index: {}]
  %s3 = inlined_call_operand.vmem [shape: f32[9,8,8], index: 3, kind: input, shape index: {}]
  %s4 = inlined_call_operand.vmem [shape: f32[1,8], index: 4, kind: input, shape index: {}]
  %s5 = inlined_call_operand.vmem [shape: f32[4,8], index: 5, kind: input, shape index: {}]
  %s6 = inlined_call_operand.vmem [shape: f32[1,8], index: 6, kind: input, shape index: {}]
  %s7 = inlined_call_operand.vmem [shape: f32[2,64,8], index: 7, kind: output, shape index: {}]
  %s8 = sld [smem:[#allocation0]]
  $region61: #{tpu_custom_call.1} parent=0
    _
  %s10 = ssub.s32 1, %s8
  %s11 = scalar_select 0, %s10, %s8
  loop: start=0, step=1, limit=4
  $region2: #{tpu_custom_call.1} parent=0 // loop_pre_header
    _
  $region3: #{tpu_custom_call.1} parent=0 // loop_header
    %s13 = sphi 0, %s17
    %p14 = scmp.ge.s32.totalorder %s13, 4
    %s23 = sphi 0, %s25
    %s26 = sphi 0, %s23
    %s27 = sphi 0, %s26
    %s43 = sphi 0, %s27
    %s47 = sphi 0, %s47
    %s49 = sphi 0, %s47
    %s50 = sphi 0, %s49
    %s64 = sphi 0, %s50
    %s68 = sphi 0, %s68
    %s70 = sphi 0, %s68
    %s71 = sphi 0, %s70
    %s85 = sphi 0, %s71
    %s89 = sphi 0, %s89
    %s91 = sphi 0, %s89
    %s92 = sphi 0, %s91
    %s106 = sphi 0, %s92
    %s110 = sphi 0, %s110
    %s112 = sphi 0, %s110
    %s113 = sphi 0, %s112
    %s127 = sphi 0, %s113
    %s131 = sphi 0, %s131
    %s133 = sphi 0, %s131
    %s134 = sphi 0, %s133
    %s148 = sphi 0, %s134
    %s152 = sphi 0, %s152
    %s154 = sphi 0, %s152
    %s155 = sphi 0, %s154
    %s169 = sphi 0, %s155
    %s175 = sphi 0, %s177
    %s178 = sphi 0, %s175
    %s179 = sphi 0, %s178
    %s195 = sphi 0, %s179
  $region4: #{tpu_custom_call.1} parent=0 // loop_header_branch
    %16 = sbr.rel (%p14) target = $region8
  $region5: #{tpu_custom_call.1} parent=0 // loop_body
    %s18 = ssub.s32 %s13, 1
    %s19 = ssub.s32 %s13, 2
    %s20 = sadd.s32 %s13, 1
    %s21 = ssub.s32 %s13, %s20
    %p22 = scmp.eq.s32.totalorder %s21, 0
    %s24 = sadd.s32 %s23, 1
    %s25 = scalar_select %p22, %s23, %s24
    %p28 = pneg %p22
    %p29 = scmp.eq.s32.totalorder %s13, 1
    %p30 = por %p28, %p29
    %p31 = scmp.ne.s32.totalorder %s23, %s26
    %p32 = scmp.eq.s32.totalorder %s13, 0
    %p33 = por %p31, %p32
    %p34 = scmp.ne.s32.totalorder %s23, %s26
    %p35 = scmp.eq.s32.totalorder %s18, 1
    %p36 = por %p34, %p35
    %p37 = scmp.ne.s32.totalorder %s26, %s27
    %p38 = scmp.eq.s32.totalorder %s18, 0
    %p39 = por %p37, %p38
    %p40 = scmp.ne.s32.totalorder %s26, %s27
    %p41 = scmp.eq.s32.totalorder %s19, 1
    %p42 = por %p40, %p41
    %p44 = scmp.ne.s32.totalorder %s27, %s43
    %p45 = scmp.eq.s32.totalorder %s19, 0
    %p46 = por %p44, %p45
    %s48 = sadd.s32 %s47, 1
    %p51 = scmp.eq.s32.totalorder %s13, 1
    %p52 = scmp.ne.s32.totalorder %s47, %s49
    %p53 = scmp.eq.s32.totalorder %s13, 0
    %p54 = por %p52, %p53
    %p55 = scmp.ne.s32.totalorder %s47, %s49
    %p56 = scmp.eq.s32.totalorder %s18, 1
    %p57 = por %p55, %p56
    %p58 = scmp.ne.s32.totalorder %s49, %s50
    %p59 = scmp.eq.s32.totalorder %s18, 0
    %p60 = por %p58, %p59
    %p61 = scmp.ne.s32.totalorder %s49, %s50
    %p62 = scmp.eq.s32.totalorder %s19, 1
    %p63 = por %p61, %p62
    %p65 = scmp.ne.s32.totalorder %s50, %s64
    %p66 = scmp.eq.s32.totalorder %s19, 0
    %p67 = por %p65, %p66
    %s69 = sadd.s32 %s68, 1
    %p72 = scmp.eq.s32.totalorder %s13, 1
    %p73 = scmp.ne.s32.totalorder %s68, %s70
    %p74 = scmp.eq.s32.totalorder %s13, 0
    %p75 = por %p73, %p74
    %p76 = scmp.ne.s32.totalorder %s68, %s70
    %p77 = scmp.eq.s32.totalorder %s18, 1
    %p78 = por %p76, %p77
    %p79 = scmp.ne.s32.totalorder %s70, %s71
    %p80 = scmp.eq.s32.totalorder %s18, 0
    %p81 = por %p79, %p80
    %p82 = scmp.ne.s32.totalorder %s70, %s71
    %p83 = scmp.eq.s32.totalorder %s19, 1
    %p84 = por %p82, %p83
    %p86 = scmp.ne.s32.totalorder %s71, %s85
    %p87 = scmp.eq.s32.totalorder %s19, 0
    %p88 = por %p86, %p87
    %s90 = sadd.s32 %s89, 1
    %p93 = scmp.eq.s32.totalorder %s13, 1
    %p94 = scmp.ne.s32.totalorder %s89, %s91
    %p95 = scmp.eq.s32.totalorder %s13, 0
    %p96 = por %p94, %p95
    %p97 = scmp.ne.s32.totalorder %s89, %s91
    %p98 = scmp.eq.s32.totalorder %s18, 1
    %p99 = por %p97, %p98
    %p100 = scmp.ne.s32.totalorder %s91, %s92
    %p101 = scmp.eq.s32.totalorder %s18, 0
    %p102 = por %p100, %p101
    %p103 = scmp.ne.s32.totalorder %s91, %s92
    %p104 = scmp.eq.s32.totalorder %s19, 1
    %p105 = por %p103, %p104
    %p107 = scmp.ne.s32.totalorder %s92, %s106
    %p108 = scmp.eq.s32.totalorder %s19, 0
    %p109 = por %p107, %p108
    %s111 = sadd.s32 %s110, 1
    %p114 = scmp.eq.s32.totalorder %s13, 1
    %p115 = scmp.ne.s32.totalorder %s110, %s112
    %p116 = scmp.eq.s32.totalorder %s13, 0
    %p117 = por %p115, %p116
    %p118 = scmp.ne.s32.totalorder %s110, %s112
    %p119 = scmp.eq.s32.totalorder %s18, 1
    %p120 = por %p118, %p119
    %p121 = scmp.ne.s32.totalorder %s112, %s113
    %p122 = scmp.eq.s32.totalorder %s18, 0
    %p123 = por %p121, %p122
    %p124 = scmp.ne.s32.totalorder %s112, %s113
    %p125 = scmp.eq.s32.totalorder %s19, 1
    %p126 = por %p124, %p125
    %p128 = scmp.ne.s32.totalorder %s113, %s127
    %p129 = scmp.eq.s32.totalorder %s19, 0
    %p130 = por %p128, %p129
    %s132 = sadd.s32 %s131, 1
    %p135 = scmp.eq.s32.totalorder %s13, 1
    %p136 = scmp.ne.s32.totalorder %s131, %s133
    %p137 = scmp.eq.s32.totalorder %s13, 0
    %p138 = por %p136, %p137
    %p139 = scmp.ne.s32.totalorder %s131, %s133
    %p140 = scmp.eq.s32.totalorder %s18, 1
    %p141 = por %p139, %p140
    %p142 = scmp.ne.s32.totalorder %s133, %s134
    %p143 = scmp.eq.s32.totalorder %s18, 0
    %p144 = por %p142, %p143
    %p145 = scmp.ne.s32.totalorder %s133, %s134
    %p146 = scmp.eq.s32.totalorder %s19, 1
    %p147 = por %p145, %p146
    %p149 = scmp.ne.s32.totalorder %s134, %s148
    %p150 = scmp.eq.s32.totalorder %s19, 0
    %p151 = por %p149, %p150
    %s153 = sadd.s32 %s152, 1
    %p156 = scmp.eq.s32.totalorder %s13, 1
    %p157 = scmp.ne.s32.totalorder %s152, %s154
    %p158 = scmp.eq.s32.totalorder %s13, 0
    %p159 = por %p157, %p158
    %p160 = scmp.ne.s32.totalorder %s152, %s154
    %p161 = scmp.eq.s32.totalorder %s18, 1
    %p162 = por %p160, %p161
    %p163 = scmp.ne.s32.totalorder %s154, %s155
    %p164 = scmp.eq.s32.totalorder %s18, 0
    %p165 = por %p163, %p164
    %p166 = scmp.ne.s32.totalorder %s154, %s155
    %p167 = scmp.eq.s32.totalorder %s19, 1
    %p168 = por %p166, %p167
    %p170 = scmp.ne.s32.totalorder %s155, %s169
    %p171 = scmp.eq.s32.totalorder %s19, 0
    %p172 = por %p170, %p171
    %s173 = ssub.s32 %s13, %s20
    %p174 = scmp.eq.s32.totalorder %s173, 0
    %s176 = sadd.s32 %s175, 1
    %s177 = scalar_select %p174, %s175, %s176
    %p180 = pneg %p174
    %p181 = scmp.eq.s32.totalorder %s13, 1
    %p182 = por %p180, %p181
    %p183 = scmp.ne.s32.totalorder %s175, %s178
    %p184 = scmp.eq.s32.totalorder %s13, 0
    %p185 = por %p183, %p184
    %p186 = scmp.ne.s32.totalorder %s175, %s178
    %p187 = scmp.eq.s32.totalorder %s18, 1
    %p188 = por %p186, %p187
    %p189 = scmp.ne.s32.totalorder %s178, %s179
    %p190 = scmp.eq.s32.totalorder %s18, 0
    %p191 = por %p189, %p190
    %p192 = scmp.ne.s32.totalorder %s178, %s179
    %p193 = scmp.eq.s32.totalorder %s19, 1
    %p194 = por %p192, %p193
    %p196 = scmp.ne.s32.totalorder %s179, %s195
    %p197 = scmp.eq.s32.totalorder %s19, 0
    %p198 = por %p196, %p197
    %p199 = scmp.le.s32.totalorder 1, %s13
    %p200 = scmp.lt.s32.totalorder %s13, 3
    %p201 = pnand %p199, %p200
    %p202 = pneg %p201
    // Predicated region
    $region9: #{tpu_custom_call.1} parent=5 // pred_check
      _
    $region10: #{tpu_custom_call.1} parent=5 // pred_check_branch
      %204 = sbr.rel (%p201) target = $region12
    $region11: #{tpu_custom_call.1} parent=5 // pred_region
      %s205 = ssub.s32 %s13, 1
      // Predicated region
      $region13: #{tpu_custom_call.1} parent=11 // pred_check
        %p206 = pneg %p60
      $region14: #{tpu_custom_call.1} parent=11 // pred_check_branch
        %208 = sbr.rel (%p206) target = $region16
      $region15: #{tpu_custom_call.1} parent=11 // pred_region
        _
      $region16: #{tpu_custom_call.1} parent=11 // pred_fallthru
        _
      // Predicated region
      $region17: #{tpu_custom_call.1} parent=11 // pred_check
        %p209 = pneg %p81
      $region18: #{tpu_custom_call.1} parent=11 // pred_check_branch
        %211 = sbr.rel (%p209) target = $region20
      $region19: #{tpu_custom_call.1} parent=11 // pred_region
        _
      $region20: #{tpu_custom_call.1} parent=11 // pred_fallthru
        _
      // Predicated region
      $region21: #{tpu_custom_call.1} parent=11 // pred_check
        %p212 = pneg %p102
      $region22: #{tpu_custom_call.1} parent=11 // pred_check_branch
        %214 = sbr.rel (%p212) target = $region24
      $region23: #{tpu_custom_call.1} parent=11 // pred_region
        _
      $region24: #{tpu_custom_call.1} parent=11 // pred_fallthru
        _
      // Predicated region
      $region25: #{tpu_custom_call.1} parent=11 // pred_check
        %p215 = pneg %p123
      $region26: #{tpu_custom_call.1} parent=11 // pred_check_branch
        %217 = sbr.rel (%p215) target = $region28
      $region27: #{tpu_custom_call.1} parent=11 // pred_region
        _
      $region28: #{tpu_custom_call.1} parent=11 // pred_fallthru
        _
      // Predicated region
      $region29: #{tpu_custom_call.1} parent=11 // pred_check
        %p218 = pneg %p144
      $region30: #{tpu_custom_call.1} parent=11 // pred_check_branch
        %220 = sbr.rel (%p218) target = $region32
      $region31: #{tpu_custom_call.1} parent=11 // pred_region
        _
      $region32: #{tpu_custom_call.1} parent=11 // pred_fallthru
        _
      // Predicated region
      $region33: #{tpu_custom_call.1} parent=11 // pred_check
        %p221 = pneg %p165
      $region34: #{tpu_custom_call.1} parent=11 // pred_check_branch
        %223 = sbr.rel (%p221) target = $region36
      $region35: #{tpu_custom_call.1} parent=11 // pred_region
        _
      $region36: #{tpu_custom_call.1} parent=11 // pred_fallthru
        _
    $region12: #{tpu_custom_call.1} parent=5 // pred_fallthru
      _
    %p224 = scmp.lt.s32.totalorder %s13, 2
    // Predicated region
    $region37: #{tpu_custom_call.1} parent=5 // pred_check
      %p225 = pneg %p224
    $region38: #{tpu_custom_call.1} parent=5 // pred_check_branch
      %227 = sbr.rel (%p225) target = $region40
    $region39: #{tpu_custom_call.1} parent=5 // pred_region
      // Predicated region
      $region41: #{tpu_custom_call.1} parent=39 // pred_check
        %p228 = pneg %p33
      $region42: #{tpu_custom_call.1} parent=39 // pred_check_branch
        %230 = sbr.rel (%p228) target = $region44
      $region43: #{tpu_custom_call.1} parent=39 // pred_region
        %p231 = scmp.lt.s32.totalorder %s13, 1
        %s232 = scalar_select %p231, %s13, 1
        %s233 = smul.addr %s232, 18
        %s234 = smul.addr %s233, 8
        %s235 = scalar_lea.vmem %s0, %s234
      $region44: #{tpu_custom_call.1} parent=39 // pred_fallthru
        _
    $region40: #{tpu_custom_call.1} parent=5 // pred_fallthru
      _
    %p236 = scmp.le.s32.totalorder 1, %s13
    %p237 = scmp.lt.s32.totalorder %s13, 3
    %p238 = pnand %p236, %p237
    %p239 = pneg %p238
    // Predicated region
    $region45: #{tpu_custom_call.1} parent=5 // pred_check
      _
    $region46: #{tpu_custom_call.1} parent=5 // pred_check_branch
      %241 = sbr.rel (%p238) target = $region48
    $region47: #{tpu_custom_call.1} parent=5 // pred_region
      %s242 = ssub.s32 %s13, 1
      %p243 = scmp.lt.s32.totalorder %s18, 1
      %s244 = scalar_select %p243, %s18, 1
      %s245 = smul.addr %s244, 18
      %s246 = smul.addr %s245, 8
      %s247 = scalar_lea.vmem %s0, %s246
      %p248 = pneg %p39
      %p249 = pneg %p36
      %p250 = pneg %p60
      %p251 = pneg %p57
      %p252 = pneg %p81
      %p253 = pneg %p78
      %p254 = pneg %p102
      %p255 = pneg %p99
      %p256 = pneg %p123
      %p257 = pneg %p120
      %p258 = pneg %p144
      %p259 = pneg %p141
      %p260 = pneg %p165
      %p261 = pneg %p162
      %p262 = pneg %p191
      %p263 = pneg %p188
      %p264 = scmp.lt.s32.totalorder %s18, 1
      %s265 = scalar_select %p264, %s18, 1
      %s266 = smul.addr %s265, 8
      %s267 = smul.addr %s266, 8
      %s268 = scalar_lea.vmem %s7, %s267
      %p269 = scmp.lt.s32.totalorder %s18, 1
      %s270 = scalar_select %p269, %s18, 1
      %s271 = smul.addr %s270, 18
      %s272 = smul.addr %s271, 8
      %s273 = scalar_lea.vmem %s0, %s272
      %p274 = scmp.lt.s32.totalorder %s18, 1
      %s275 = scalar_select %p274, %s18, 1
      %s276 = smul.addr %s275, 8
      %s277 = smul.addr %s276, 8
      %s278 = scalar_lea.vmem %s7, %s277
      %v279 = vld [vmem:[%s273] sm:$0xff]
      %v280 = vld [vmem:[%s273 + $0x10] sm:$0xff]
      %v281 = vld [vmem:[%s273 + $0x20] sm:$0xff]
      %v282 = vld [vmem:[%s273 + $0x30] sm:$0xff]
      %v283 = vld [vmem:[%s273 + $0x40] sm:$0xff]
      %v284 = vld [vmem:[%s273 + $0x50] sm:$0xff]
      %v285 = vld [vmem:[%s273 + $0x60] sm:$0xff]
      %v286 = vld [vmem:[%s273 + $0x70] sm:$0xff]
      %v287 = vld [vmem:[%s1] sm:$0xf]
      %s288 = scalar_lea.vmem %s1, 4
      %v289 = vld [vmem:[%s288] sm:$0xf]
      %298 = vrot.lane.b32.xlu0 %v279, 124
      %v299 = vpop.permute.xlu0 %298
      %300 = vrot.lane.b32.xlu0 %v280, 124
      %v301 = vpop.permute.xlu0 %300
      %302 = vrot.lane.b32.xlu0 %v281, 124
      %v303 = vpop.permute.xlu0 %302
      %304 = vrot.lane.b32.xlu0 %v282, 124
      %v305 = vpop.permute.xlu0 %304
      %306 = vrot.lane.b32.xlu0 %v283, 124
      %v307 = vpop.permute.xlu0 %306
      %308 = vrot.lane.b32.xlu0 %v284, 124
      %v309 = vpop.permute.xlu0 %308
      %310 = vrot.lane.b32.xlu0 %v285, 124
      %v311 = vpop.permute.xlu0 %310
      %312 = vrot.lane.b32.xlu0 %v286, 124
      %v313 = vpop.permute.xlu0 %312
      %vm314 = vcmask 31744
      %v315 = vsel %vm314, %v299, 0
      %v317 = vsel %vm314, %v301, 0
      %v319 = vsel %vm314, %v303, 0
      %v321 = vsel %vm314, %v305, 0
      %v323 = vsel %vm314, %v307, 0
      %v325 = vsel %vm314, %v309, 0
      %v327 = vsel %vm314, %v311, 0
      %v329 = vsel %vm314, %v313, 0
      %vm331 = vcmask 1043456
      %v333 = vsel %vm331, %v289, 0
      %335 = vmatpush.msra.mxu0 0.0
      %336 = vmatpush.msra.mxu0 0.0
      %337 = vmatpush.msra.mxu0 0.0
      %338 = vmatpush.msra.mxu0 0.0
      %339 = vmatpush.msra.mxu0 0.0
      %340 = vmatpush.msra.mxu0 0.0
      %341 = vmatpush.msra.mxu0 0.0
      %342 = vmatpush.msra.mxu0 0.0
      %343 = vmatpush.msra.mxu0 0.0
      %344 = vmatpush.msra.mxu0 0.0
      %345 = vmatpush.msra.mxu0 0.0
      %346 = vmatpush.msra.mxu0 0.0
      %347 = vmatpush.msra.mxu0 0.0
      %348 = vmatpush.msra.mxu0 0.0
      %349 = vmatpush.msra.mxu0 0.0
      %350 = vmatpush.msra.mxu0 %v333
      %351 = vmatmul.f32.gmra.mxu0 %v315
      %v352 = vpop.f32.mrf.mxu0
      %v353 = vadd.f32 0.0, %v352
      %354 = vmatmul.f32.gmra.mxu0 %v317
      %v355 = vpop.f32.mrf.mxu0
      %v356 = vadd.f32 0.0, %v355
      %357 = vmatmul.f32.gmra.mxu0 %v319
      %v358 = vpop.f32.mrf.mxu0
      %v359 = vadd.f32 0.0, %v358
      %360 = vmatmul.f32.gmra.mxu0 %v321
      %v361 = vpop.f32.mrf.mxu0
      %v362 = vadd.f32 0.0, %v361
      %363 = vmatmul.f32.gmra.mxu0 %v323
      %v364 = vpop.f32.mrf.mxu0
      %v365 = vadd.f32 0.0, %v364
      %366 = vmatmul.f32.gmra.mxu0 %v325
      %v367 = vpop.f32.mrf.mxu0
      %v368 = vadd.f32 0.0, %v367
      %369 = vmatmul.f32.gmra.mxu0 %v327
      %v370 = vpop.f32.mrf.mxu0
      %v371 = vadd.f32 0.0, %v370
      %372 = vmatmul.f32.gmra.mxu0 %v329
      %v373 = vpop.f32.mrf.mxu0
      %v374 = vadd.f32 0.0, %v373
      %375 = vdwg.mxu0
      %v376 = vsel %vm314, %v279, 0
      %v378 = vsel %vm314, %v280, 0
      %v380 = vsel %vm314, %v281, 0
      %v382 = vsel %vm314, %v282, 0
      %v384 = vsel %vm314, %v283, 0
      %v386 = vsel %vm314, %v284, 0
      %v388 = vsel %vm314, %v285, 0
      %v390 = vsel %vm314, %v286, 0
      %v393 = vsel %vm331, %v287, 0
      %395 = vmatpush.msra.mxu0 0.0
      %396 = vmatpush.msra.mxu0 0.0
      %397 = vmatpush.msra.mxu0 0.0
      %398 = vmatpush.msra.mxu0 0.0
      %399 = vmatpush.msra.mxu0 0.0
      %400 = vmatpush.msra.mxu0 0.0
      %401 = vmatpush.msra.mxu0 0.0
      %402 = vmatpush.msra.mxu0 0.0
      %403 = vmatpush.msra.mxu0 0.0
      %404 = vmatpush.msra.mxu0 0.0
      %405 = vmatpush.msra.mxu0 0.0
      %406 = vmatpush.msra.mxu0 0.0
      %407 = vmatpush.msra.mxu0 0.0
      %408 = vmatpush.msra.mxu0 0.0
      %409 = vmatpush.msra.mxu0 0.0
      %410 = vmatpush.msra.mxu0 %v393
      %411 = vmatmul.f32.gmra.mxu0 %v376
      %v412 = vpop.f32.mrf.mxu0
      %v413 = vadd.f32 %v353, %v412
      %414 = vmatmul.f32.gmra.mxu0 %v378
      %v415 = vpop.f32.mrf.mxu0
      %v416 = vadd.f32 %v356, %v415
      %417 = vmatmul.f32.gmra.mxu0 %v380
      %v418 = vpop.f32.mrf.mxu0
      %v419 = vadd.f32 %v359, %v418
      %420 = vmatmul.f32.gmra.mxu0 %v382
      %v421 = vpop.f32.mrf.mxu0
      %v422 = vadd.f32 %v362, %v421
      %423 = vmatmul.f32.gmra.mxu0 %v384
      %v424 = vpop.f32.mrf.mxu0
      %v425 = vadd.f32 %v365, %v424
      %426 = vmatmul.f32.gmra.mxu0 %v386
      %v427 = vpop.f32.mrf.mxu0
      %v428 = vadd.f32 %v368, %v427
      %429 = vmatmul.f32.gmra.mxu0 %v388
      %v430 = vpop.f32.mrf.mxu0
      %v431 = vadd.f32 %v371, %v430
      %432 = vmatmul.f32.gmra.mxu0 %v390
      %v433 = vpop.f32.mrf.mxu0
      %v434 = vadd.f32 %v374, %v433
      %435 = vdwg.mxu0
      %v436 = vld [vmem:[%s273 + $0x1] sm:$0xff]
      %v437 = vld [vmem:[%s273 + $0x11] sm:$0xff]
      %v438 = vld [vmem:[%s273 + $0x21] sm:$0xff]
      %v439 = vld [vmem:[%s273 + $0x31] sm:$0xff]
      %v440 = vld [vmem:[%s273 + $0x41] sm:$0xff]
      %v441 = vld [vmem:[%s273 + $0x51] sm:$0xff]
      %v442 = vld [vmem:[%s273 + $0x61] sm:$0xff]
      %v443 = vld [vmem:[%s273 + $0x71] sm:$0xff]
      %s444 = scalar_lea.vmem %s1, 8
      %v445 = vld [vmem:[%s444] sm:$0xf]
      %v447 = vsel %vm314, %v436, 0
      %v450 = vsel %vm314, %v437, 0
      %v453 = vsel %vm314, %v438, 0
      %v456 = vsel %vm314, %v439, 0
      %v459 = vsel %vm314, %v440, 0
      %v462 = vsel %vm314, %v441, 0
      %v465 = vsel %vm314, %v442, 0
      %v468 = vsel %vm314, %v443, 0
      %v471 = vsel %vm331, %v445, 0
      %473 = vmatpush.msra.mxu0 0.0
      %474 = vmatpush.msra.mxu0 0.0
      %475 = vmatpush.msra.mxu0 0.0
      %476 = vmatpush.msra.mxu0 0.0
      %477 = vmatpush.msra.mxu0 0.0
      %478 = vmatpush.msra.mxu0 0.0
      %479 = vmatpush.msra.mxu0 0.0
      %480 = vmatpush.msra.mxu0 0.0
      %481 = vmatpush.msra.mxu0 0.0
      %482 = vmatpush.msra.mxu0 0.0
      %483 = vmatpush.msra.mxu0 0.0
      %484 = vmatpush.msra.mxu0 0.0
      %485 = vmatpush.msra.mxu0 0.0
      %486 = vmatpush.msra.mxu0 0.0
      %487 = vmatpush.msra.mxu0 0.0
      %488 = vmatpush.msra.mxu0 %v471
      %489 = vmatmul.f32.gmra.mxu0 %v447
      %v490 = vpop.f32.mrf.mxu0
      %v491 = vadd.f32 0.0, %v490
      %492 = vmatmul.f32.gmra.mxu0 %v450
      %v493 = vpop.f32.mrf.mxu0
      %v494 = vadd.f32 0.0, %v493
      %495 = vmatmul.f32.gmra.mxu0 %v453
      %v496 = vpop.f32.mrf.mxu0
      %v497 = vadd.f32 0.0, %v496
      %498 = vmatmul.f32.gmra.mxu0 %v456
      %v499 = vpop.f32.mrf.mxu0
      %v500 = vadd.f32 0.0, %v499
      %501 = vmatmul.f32.gmra.mxu0 %v459
      %v502 = vpop.f32.mrf.mxu0
      %v503 = vadd.f32 0.0, %v502
      %504 = vmatmul.f32.gmra.mxu0 %v462
      %v505 = vpop.f32.mrf.mxu0
      %v506 = vadd.f32 0.0, %v505
      %507 = vmatmul.f32.gmra.mxu0 %v465
      %v508 = vpop.f32.mrf.mxu0
      %v509 = vadd.f32 0.0, %v508
      %510 = vmatmul.f32.gmra.mxu0 %v468
      %v511 = vpop.f32.mrf.mxu0
      %v512 = vadd.f32 0.0, %v511
      %513 = vdwg.mxu0
      %v514 = vadd.f32 %v413, %v491
      %v515 = vadd.f32 %v416, %v494
      %v516 = vadd.f32 %v419, %v497
      %v517 = vadd.f32 %v422, %v500
      %v518 = vadd.f32 %v425, %v503
      %v519 = vadd.f32 %v428, %v506
      %v520 = vadd.f32 %v431, %v509
      %v521 = vadd.f32 %v434, %v512
      %s522 = scalar_lea.vmem %s1, 12
      %v523 = vld [vmem:[%s522] sm:$0xf]
      %524 = vrot.lane.b32.xlu0 %v279, 120
      %v525 = vpop.permute.xlu0 %524
      %526 = vrot.lane.b32.xlu0 %v280, 120
      %v527 = vpop.permute.xlu0 %526
      %528 = vrot.lane.b32.xlu0 %v281, 120
      %v529 = vpop.permute.xlu0 %528
      %530 = vrot.lane.b32.xlu0 %v282, 120
      %v531 = vpop.permute.xlu0 %530
      %532 = vrot.lane.b32.xlu0 %v283, 120
      %v533 = vpop.permute.xlu0 %532
      %534 = vrot.lane.b32.xlu0 %v284, 120
      %v535 = vpop.permute.xlu0 %534
      %536 = vrot.lane.b32.xlu0 %v285, 120
      %v537 = vpop.permute.xlu0 %536
      %538 = vrot.lane.b32.xlu0 %v286, 120
      %v539 = vpop.permute.xlu0 %538
      %v540 = vsel %vm314, %v525, 0
      %v542 = vsel %vm314, %v527, 0
      %v544 = vsel %vm314, %v529, 0
      %v546 = vsel %vm314, %v531, 0
      %v548 = vsel %vm314, %v533, 0
      %v550 = vsel %vm314, %v535, 0
      %v552 = vsel %vm314, %v537, 0
      %v554 = vsel %vm314, %v539, 0
      %v557 = vsel %vm331, %v523, 0
      %559 = vmatpush.msra.mxu0 0.0
      %560 = vmatpush.msra.mxu0 0.0
      %561 = vmatpush.msra.mxu0 0.0
      %562 = vmatpush.msra.mxu0 0.0
      %563 = vmatpush.msra.mxu0 0.0
      %564 = vmatpush.msra.mxu0 0.0
      %565 = vmatpush.msra.mxu0 0.0
      %566 = vmatpush.msra.mxu0 0.0
      %567 = vmatpush.msra.mxu0 0.0
      %568 = vmatpush.msra.mxu0 0.0
      %569 = vmatpush.msra.mxu0 0.0
      %570 = vmatpush.msra.mxu0 0.0
      %571 = vmatpush.msra.mxu0 0.0
      %572 = vmatpush.msra.mxu0 0.0
      %573 = vmatpush.msra.mxu0 0.0
      %574 = vmatpush.msra.mxu0 %v557
      %575 = vmatmul.f32.gmra.mxu0 %v540
      %v576 = vpop.f32.mrf.mxu0
      %v577 = vadd.f32 0.0, %v576
      %578 = vmatmul.f32.gmra.mxu0 %v542
      %v579 = vpop.f32.mrf.mxu0
      %v580 = vadd.f32 0.0, %v579
      %581 = vmatmul.f32.gmra.mxu0 %v544
      %v582 = vpop.f32.mrf.mxu0
      %v583 = vadd.f32 0.0, %v582
      %584 = vmatmul.f32.gmra.mxu0 %v546
      %v585 = vpop.f32.mrf.mxu0
      %v586 = vadd.f32 0.0, %v585
      %587 = vmatmul.f32.gmra.mxu0 %v548
      %v588 = vpop.f32.mrf.mxu0
      %v589 = vadd.f32 0.0, %v588
      %590 = vmatmul.f32.gmra.mxu0 %v550
      %v591 = vpop.f32.mrf.mxu0
      %v592 = vadd.f32 0.0, %v591
      %593 = vmatmul.f32.gmra.mxu0 %v552
      %v594 = vpop.f32.mrf.mxu0
      %v595 = vadd.f32 0.0, %v594
      %596 = vmatmul.f32.gmra.mxu0 %v554
      %v597 = vpop.f32.mrf.mxu0
      %v598 = vadd.f32 0.0, %v597
      %599 = vdwg.mxu0
      %v600 = vadd.f32 %v514, %v577
      %v601 = vadd.f32 %v515, %v580
      %v602 = vadd.f32 %v516, %v583
      %v603 = vadd.f32 %v517, %v586
      %v604 = vadd.f32 %v518, %v589
      %v605 = vadd.f32 %v519, %v592
      %v606 = vadd.f32 %v520, %v595
      %v607 = vadd.f32 %v521, %v598
      %s608 = scalar_lea.vmem %s1, 16
      %v609 = vld [vmem:[%s608] sm:$0xf]
      %610 = vrot.lane.b32.xlu0 %v279, 116
      %v611 = vpop.permute.xlu0 %610
      %612 = vrot.lane.b32.xlu0 %v280, 116
      %v613 = vpop.permute.xlu0 %612
      %614 = vrot.lane.b32.xlu0 %v281, 116
      %v615 = vpop.permute.xlu0 %614
      %616 = vrot.lane.b32.xlu0 %v282, 116
      %v617 = vpop.permute.xlu0 %616
      %618 = vrot.lane.b32.xlu0 %v283, 116
      %v619 = vpop.permute.xlu0 %618
      %620 = vrot.lane.b32.xlu0 %v284, 116
      %v621 = vpop.permute.xlu0 %620
      %622 = vrot.lane.b32.xlu0 %v285, 116
      %v623 = vpop.permute.xlu0 %622
      %624 = vrot.lane.b32.xlu0 %v286, 116
      %v625 = vpop.permute.xlu0 %624
      %v626 = vsel %vm314, %v611, 0
      %v628 = vsel %vm314, %v613, 0
      %v630 = vsel %vm314, %v615, 0
      %v632 = vsel %vm314, %v617, 0
      %v634 = vsel %vm314, %v619, 0
      %v636 = vsel %vm314, %v621, 0
      %v638 = vsel %vm314, %v623, 0
      %v640 = vsel %vm314, %v625, 0
      %v643 = vsel %vm331, %v609, 0
      %645 = vmatpush.msra.mxu0 0.0
      %646 = vmatpush.msra.mxu0 0.0
      %647 = vmatpush.msra.mxu0 0.0
      %648 = vmatpush.msra.mxu0 0.0
      %649 = vmatpush.msra.mxu0 0.0
      %650 = vmatpush.msra.mxu0 0.0
      %651 = vmatpush.msra.mxu0 0.0
      %652 = vmatpush.msra.mxu0 0.0
      %653 = vmatpush.msra.mxu0 0.0
      %654 = vmatpush.msra.mxu0 0.0
      %655 = vmatpush.msra.mxu0 0.0
      %656 = vmatpush.msra.mxu0 0.0
      %657 = vmatpush.msra.mxu0 0.0
      %658 = vmatpush.msra.mxu0 0.0
      %659 = vmatpush.msra.mxu0 0.0
      %660 = vmatpush.msra.mxu0 %v643
      %661 = vmatmul.f32.gmra.mxu0 %v626
      %v662 = vpop.f32.mrf.mxu0
      %v663 = vadd.f32 0.0, %v662
      %664 = vmatmul.f32.gmra.mxu0 %v628
      %v665 = vpop.f32.mrf.mxu0
      %v666 = vadd.f32 0.0, %v665
      %667 = vmatmul.f32.gmra.mxu0 %v630
      %v668 = vpop.f32.mrf.mxu0
      %v669 = vadd.f32 0.0, %v668
      %670 = vmatmul.f32.gmra.mxu0 %v632
      %v671 = vpop.f32.mrf.mxu0
      %v672 = vadd.f32 0.0, %v671
      %673 = vmatmul.f32.gmra.mxu0 %v634
      %v674 = vpop.f32.mrf.mxu0
      %v675 = vadd.f32 0.0, %v674
      %676 = vmatmul.f32.gmra.mxu0 %v636
      %v677 = vpop.f32.mrf.mxu0
      %v678 = vadd.f32 0.0, %v677
      %679 = vmatmul.f32.gmra.mxu0 %v638
      %v680 = vpop.f32.mrf.mxu0
      %v681 = vadd.f32 0.0, %v680
      %682 = vmatmul.f32.gmra.mxu0 %v640
      %v683 = vpop.f32.mrf.mxu0
      %v684 = vadd.f32 0.0, %v683
      %685 = vdwg.mxu0
      %v686 = vadd.f32 %v600, %v663
      %v687 = vadd.f32 %v601, %v666
      %v688 = vadd.f32 %v602, %v669
      %v689 = vadd.f32 %v603, %v672
      %v690 = vadd.f32 %v604, %v675
      %v691 = vadd.f32 %v605, %v678
      %v692 = vadd.f32 %v606, %v681
      %v693 = vadd.f32 %v607, %v684
      %s694 = scalar_lea.vmem %s1, 20
      %v695 = vld [vmem:[%s694] sm:$0xf]
      %696 = vrot.lane.b32.xlu0 %v436, 120
      %v697 = vpop.permute.xlu0 %696
      %698 = vrot.lane.b32.xlu0 %v437, 120
      %v699 = vpop.permute.xlu0 %698
      %700 = vrot.lane.b32.xlu0 %v438, 120
      %v701 = vpop.permute.xlu0 %700
      %702 = vrot.lane.b32.xlu0 %v439, 120
      %v703 = vpop.permute.xlu0 %702
      %704 = vrot.lane.b32.xlu0 %v440, 120
      %v705 = vpop.permute.xlu0 %704
      %706 = vrot.lane.b32.xlu0 %v441, 120
      %v707 = vpop.permute.xlu0 %706
      %708 = vrot.lane.b32.xlu0 %v442, 120
      %v709 = vpop.permute.xlu0 %708
      %710 = vrot.lane.b32.xlu0 %v443, 120
      %v711 = vpop.permute.xlu0 %710
      %v712 = vsel %vm314, %v697, 0
      %v714 = vsel %vm314, %v699, 0
      %v716 = vsel %vm314, %v701, 0
      %v718 = vsel %vm314, %v703, 0
      %v720 = vsel %vm314, %v705, 0
      %v722 = vsel %vm314, %v707, 0
      %v724 = vsel %vm314, %v709, 0
      %v726 = vsel %vm314, %v711, 0
      %v729 = vsel %vm331, %v695, 0
      %731 = vmatpush.msra.mxu0 0.0
      %732 = vmatpush.msra.mxu0 0.0
      %733 = vmatpush.msra.mxu0 0.0
      %734 = vmatpush.msra.mxu0 0.0
      %735 = vmatpush.msra.mxu0 0.0
      %736 = vmatpush.msra.mxu0 0.0
      %737 = vmatpush.msra.mxu0 0.0
      %738 = vmatpush.msra.mxu0 0.0
      %739 = vmatpush.msra.mxu0 0.0
      %740 = vmatpush.msra.mxu0 0.0
      %741 = vmatpush.msra.mxu0 0.0
      %742 = vmatpush.msra.mxu0 0.0
      %743 = vmatpush.msra.mxu0 0.0
      %744 = vmatpush.msra.mxu0 0.0
      %745 = vmatpush.msra.mxu0 0.0
      %746 = vmatpush.msra.mxu0 %v729
      %747 = vmatmul.f32.gmra.mxu0 %v712
      %v748 = vpop.f32.mrf.mxu0
      %v749 = vadd.f32 0.0, %v748
      %750 = vmatmul.f32.gmra.mxu0 %v714
      %v751 = vpop.f32.mrf.mxu0
      %v752 = vadd.f32 0.0, %v751
      %753 = vmatmul.f32.gmra.mxu0 %v716
      %v754 = vpop.f32.mrf.mxu0
      %v755 = vadd.f32 0.0, %v754
      %756 = vmatmul.f32.gmra.mxu0 %v718
      %v757 = vpop.f32.mrf.mxu0
      %v758 = vadd.f32 0.0, %v757
      %759 = vmatmul.f32.gmra.mxu0 %v720
      %v760 = vpop.f32.mrf.mxu0
      %v761 = vadd.f32 0.0, %v760
      %762 = vmatmul.f32.gmra.mxu0 %v722
      %v763 = vpop.f32.mrf.mxu0
      %v764 = vadd.f32 0.0, %v763
      %765 = vmatmul.f32.gmra.mxu0 %v724
      %v766 = vpop.f32.mrf.mxu0
      %v767 = vadd.f32 0.0, %v766
      %768 = vmatmul.f32.gmra.mxu0 %v726
      %v769 = vpop.f32.mrf.mxu0
      %v770 = vadd.f32 0.0, %v769
      %771 = vdwg.mxu0
      %v772 = vadd.f32 %v686, %v749
      %v773 = vadd.f32 %v687, %v752
      %v774 = vadd.f32 %v688, %v755
      %v775 = vadd.f32 %v689, %v758
      %v776 = vadd.f32 %v690, %v761
      %v777 = vadd.f32 %v691, %v764
      %v778 = vadd.f32 %v692, %v767
      %v779 = vadd.f32 %v693, %v770
      %s780 = scalar_lea.vmem %s273, 16
      %v781 = vld [vmem:[%s780] sm:$0xff]
      %v782 = vld [vmem:[%s780 + $0x10] sm:$0xff]
      %v783 = vld [vmem:[%s780 + $0x20] sm:$0xff]
      %v784 = vld [vmem:[%s780 + $0x30] sm:$0xff]
      %v785 = vld [vmem:[%s780 + $0x40] sm:$0xff]
      %v786 = vld [vmem:[%s780 + $0x50] sm:$0xff]
      %v787 = vld [vmem:[%s780 + $0x60] sm:$0xff]
      %v788 = vld [vmem:[%s780 + $0x70] sm:$0xff]
      %s789 = scalar_lea.vmem %s1, 24
      %v790 = vld [vmem:[%s789] sm:$0xf]
      %v792 = vsel %vm314, %v781, 0
      %v795 = vsel %vm314, %v782, 0
      %v798 = vsel %vm314, %v783, 0
      %v801 = vsel %vm314, %v784, 0
      %v804 = vsel %vm314, %v785, 0
      %v807 = vsel %vm314, %v786, 0
      %v810 = vsel %vm314, %v787, 0
      %v813 = vsel %vm314, %v788, 0
      %v816 = vsel %vm331, %v790, 0
      %818 = vmatpush.msra.mxu0 0.0
      %819 = vmatpush.msra.mxu0 0.0
      %820 = vmatpush.msra.mxu0 0.0
      %821 = vmatpush.msra.mxu0 0.0
      %822 = vmatpush.msra.mxu0 0.0
      %823 = vmatpush.msra.mxu0 0.0
      %824 = vmatpush.msra.mxu0 0.0
      %825 = vmatpush.msra.mxu0 0.0
      %826 = vmatpush.msra.mxu0 0.0
      %827 = vmatpush.msra.mxu0 0.0
      %828 = vmatpush.msra.mxu0 0.0
      %829 = vmatpush.msra.mxu0 0.0
      %830 = vmatpush.msra.mxu0 0.0
      %831 = vmatpush.msra.mxu0 0.0
      %832 = vmatpush.msra.mxu0 0.0
      %833 = vmatpush.msra.mxu0 %v816
      %834 = vmatmul.f32.gmra.mxu0 %v792
      %v835 = vpop.f32.mrf.mxu0
      %v836 = vadd.f32 0.0, %v835
      %837 = vmatmul.f32.gmra.mxu0 %v795
      %v838 = vpop.f32.mrf.mxu0
      %v839 = vadd.f32 0.0, %v838
      %840 = vmatmul.f32.gmra.mxu0 %v798
      %v841 = vpop.f32.mrf.mxu0
      %v842 = vadd.f32 0.0, %v841
      %843 = vmatmul.f32.gmra.mxu0 %v801
      %v844 = vpop.f32.mrf.mxu0
      %v845 = vadd.f32 0.0, %v844
      %846 = vmatmul.f32.gmra.mxu0 %v804
      %v847 = vpop.f32.mrf.mxu0
      %v848 = vadd.f32 0.0, %v847
      %849 = vmatmul.f32.gmra.mxu0 %v807
      %v850 = vpop.f32.mrf.mxu0
      %v851 = vadd.f32 0.0, %v850
      %852 = vmatmul.f32.gmra.mxu0 %v810
      %v853 = vpop.f32.mrf.mxu0
      %v854 = vadd.f32 0.0, %v853
      %855 = vmatmul.f32.gmra.mxu0 %v813
      %v856 = vpop.f32.mrf.mxu0
      %v857 = vadd.f32 0.0, %v856
      %858 = vdwg.mxu0
      %v859 = vadd.f32 %v772, %v836
      %v860 = vadd.f32 %v773, %v839
      %v861 = vadd.f32 %v774, %v842
      %v862 = vadd.f32 %v775, %v845
      %v863 = vadd.f32 %v776, %v848
      %v864 = vadd.f32 %v777, %v851
      %v865 = vadd.f32 %v778, %v854
      %v866 = vadd.f32 %v779, %v857
      %s867 = scalar_lea.vmem %s1, 28
      %v868 = vld [vmem:[%s867] sm:$0xf]
      %869 = vrot.lane.b32.xlu0 %v781, 124
      %v870 = vpop.permute.xlu0 %869
      %871 = vrot.lane.b32.xlu0 %v782, 124
      %v872 = vpop.permute.xlu0 %871
      %873 = vrot.lane.b32.xlu0 %v783, 124
      %v874 = vpop.permute.xlu0 %873
      %875 = vrot.lane.b32.xlu0 %v784, 124
      %v876 = vpop.permute.xlu0 %875
      %877 = vrot.lane.b32.xlu0 %v785, 124
      %v878 = vpop.permute.xlu0 %877
      %879 = vrot.lane.b32.xlu0 %v786, 124
      %v880 = vpop.permute.xlu0 %879
      %881 = vrot.lane.b32.xlu0 %v787, 124
      %v882 = vpop.permute.xlu0 %881
      %883 = vrot.lane.b32.xlu0 %v788, 124
      %v884 = vpop.permute.xlu0 %883
      %v885 = vsel %vm314, %v870, 0
      %v887 = vsel %vm314, %v872, 0
      %v889 = vsel %vm314, %v874, 0
      %v891 = vsel %vm314, %v876, 0
      %v893 = vsel %vm314, %v878, 0
      %v895 = vsel %vm314, %v880, 0
      %v897 = vsel %vm314, %v882, 0
      %v899 = vsel %vm314, %v884, 0
      %v902 = vsel %vm331, %v868, 0
      %904 = vmatpush.msra.mxu0 0.0
      %905 = vmatpush.msra.mxu0 0.0
      %906 = vmatpush.msra.mxu0 0.0
      %907 = vmatpush.msra.mxu0 0.0
      %908 = vmatpush.msra.mxu0 0.0
      %909 = vmatpush.msra.mxu0 0.0
      %910 = vmatpush.msra.mxu0 0.0
      %911 = vmatpush.msra.mxu0 0.0
      %912 = vmatpush.msra.mxu0 0.0
      %913 = vmatpush.msra.mxu0 0.0
      %914 = vmatpush.msra.mxu0 0.0
      %915 = vmatpush.msra.mxu0 0.0
      %916 = vmatpush.msra.mxu0 0.0
      %917 = vmatpush.msra.mxu0 0.0
      %918 = vmatpush.msra.mxu0 0.0
      %919 = vmatpush.msra.mxu0 %v902
      %920 = vmatmul.f32.gmra.mxu0 %v885
      %v921 = vpop.f32.mrf.mxu0
      %v922 = vadd.f32 0.0, %v921
      %923 = vmatmul.f32.gmra.mxu0 %v887
      %v924 = vpop.f32.mrf.mxu0
      %v925 = vadd.f32 0.0, %v924
      %926 = vmatmul.f32.gmra.mxu0 %v889
      %v927 = vpop.f32.mrf.mxu0
      %v928 = vadd.f32 0.0, %v927
      %929 = vmatmul.f32.gmra.mxu0 %v891
      %v930 = vpop.f32.mrf.mxu0
      %v931 = vadd.f32 0.0, %v930
      %932 = vmatmul.f32.gmra.mxu0 %v893
      %v933 = vpop.f32.mrf.mxu0
      %v934 = vadd.f32 0.0, %v933
      %935 = vmatmul.f32.gmra.mxu0 %v895
      %v936 = vpop.f32.mrf.mxu0
      %v937 = vadd.f32 0.0, %v936
      %938 = vmatmul.f32.gmra.mxu0 %v897
      %v939 = vpop.f32.mrf.mxu0
      %v940 = vadd.f32 0.0, %v939
      %941 = vmatmul.f32.gmra.mxu0 %v899
      %v942 = vpop.f32.mrf.mxu0
      %v943 = vadd.f32 0.0, %v942
      %944 = vdwg.mxu0
      %v945 = vadd.f32 %v859, %v922
      %v946 = vadd.f32 %v860, %v925
      %v947 = vadd.f32 %v861, %v928
      %v948 = vadd.f32 %v862, %v931
      %v949 = vadd.f32 %v863, %v934
      %v950 = vadd.f32 %v864, %v937
      %v951 = vadd.f32 %v865, %v940
      %v952 = vadd.f32 %v866, %v943
      %v953 = vld [vmem:[%s780 + $0x1] sm:$0xff]
      %v954 = vld [vmem:[%s780 + $0x11] sm:$0xff]
      %v955 = vld [vmem:[%s780 + $0x21] sm:$0xff]
      %v956 = vld [vmem:[%s780 + $0x31] sm:$0xff]
      %v957 = vld [vmem:[%s780 + $0x41] sm:$0xff]
      %v958 = vld [vmem:[%s780 + $0x51] sm:$0xff]
      %v959 = vld [vmem:[%s780 + $0x61] sm:$0xff]
      %v960 = vld [vmem:[%s780 + $0x71] sm:$0xff]
      %s961 = scalar_lea.vmem %s1, 32
      %v962 = vld [vmem:[%s961] sm:$0xf]
      %v964 = vsel %vm314, %v953, 0
      %v967 = vsel %vm314, %v954, 0
      %v970 = vsel %vm314, %v955, 0
      %v973 = vsel %vm314, %v956, 0
      %v976 = vsel %vm314, %v957, 0
      %v979 = vsel %vm314, %v958, 0
      %v982 = vsel %vm314, %v959, 0
      %v985 = vsel %vm314, %v960, 0
      %v988 = vsel %vm331, %v962, 0
      %990 = vmatpush.msra.mxu0 0.0
      %991 = vmatpush.msra.mxu0 0.0
      %992 = vmatpush.msra.mxu0 0.0
      %993 = vmatpush.msra.mxu0 0.0
      %994 = vmatpush.msra.mxu0 0.0
      %995 = vmatpush.msra.mxu0 0.0
      %996 = vmatpush.msra.mxu0 0.0
      %997 = vmatpush.msra.mxu0 0.0
      %998 = vmatpush.msra.mxu0 0.0
      %999 = vmatpush.msra.mxu0 0.0
      %1000 = vmatpush.msra.mxu0 0.0
      %1001 = vmatpush.msra.mxu0 0.0
      %1002 = vmatpush.msra.mxu0 0.0
      %1003 = vmatpush.msra.mxu0 0.0
      %1004 = vmatpush.msra.mxu0 0.0
      %1005 = vmatpush.msra.mxu0 %v988
      %1006 = vmatmul.f32.gmra.mxu0 %v964
      %v1007 = vpop.f32.mrf.mxu0
      %v1008 = vadd.f32 0.0, %v1007
      %1009 = vmatmul.f32.gmra.mxu0 %v967
      %v1010 = vpop.f32.mrf.mxu0
      %v1011 = vadd.f32 0.0, %v1010
      %1012 = vmatmul.f32.gmra.mxu0 %v970
      %v1013 = vpop.f32.mrf.mxu0
      %v1014 = vadd.f32 0.0, %v1013
      %1015 = vmatmul.f32.gmra.mxu0 %v973
      %v1016 = vpop.f32.mrf.mxu0
      %v1017 = vadd.f32 0.0, %v1016
      %1018 = vmatmul.f32.gmra.mxu0 %v976
      %v1019 = vpop.f32.mrf.mxu0
      %v1020 = vadd.f32 0.0, %v1019
      %1021 = vmatmul.f32.gmra.mxu0 %v979
      %v1022 = vpop.f32.mrf.mxu0
      %v1023 = vadd.f32 0.0, %v1022
      %1024 = vmatmul.f32.gmra.mxu0 %v982
      %v1025 = vpop.f32.mrf.mxu0
      %v1026 = vadd.f32 0.0, %v1025
      %1027 = vmatmul.f32.gmra.mxu0 %v985
      %v1028 = vpop.f32.mrf.mxu0
      %v1029 = vadd.f32 0.0, %v1028
      %1030 = vdwg.mxu0
      %v1031 = vadd.f32 %v945, %v1008
      %v1032 = vadd.f32 %v946, %v1011
      %v1033 = vadd.f32 %v947, %v1014
      %v1034 = vadd.f32 %v948, %v1017
      %v1035 = vadd.f32 %v949, %v1020
      %v1036 = vadd.f32 %v950, %v1023
      %v1037 = vadd.f32 %v951, %v1026
      %v1038 = vadd.f32 %v952, %v1029
      %v1039 = vld [vmem:[%s2] sm:$0x1]
      %v1041 = vperm.slane %v1039, 0
      %v1043 = vadd.f32 %v1031, %v1041
      %v1044 = vadd.f32 %v1032, %v1041
      %v1045 = vadd.f32 %v1033, %v1041
      %v1046 = vadd.f32 %v1034, %v1041
      %v1047 = vadd.f32 %v1035, %v1041
      %v1048 = vadd.f32 %v1036, %v1041
      %v1049 = vadd.f32 %v1037, %v1041
      %v1050 = vadd.f32 %v1038, %v1041
      %v1051 = vmax.f32 %v1043, 0.0
      %v1052 = vmax.f32 %v1044, 0.0
      %v1053 = vmax.f32 %v1045, 0.0
      %v1054 = vmax.f32 %v1046, 0.0
      %v1055 = vmax.f32 %v1047, 0.0
      %v1056 = vmax.f32 %v1048, 0.0
      %v1057 = vmax.f32 %v1049, 0.0
      %v1058 = vmax.f32 %v1050, 0.0
      %vm1059 = vcmask 64512
      %1060 = vst.msk [vmem:[#allocation2] sm:$0xff] %vm1059, 0.0
      %vm1061 = vcmask 58368
      %1062 = vst.msk [vmem:[#allocation2 + $0x8] sm:$0x3] %vm1061, 0.0
      %1063 = vst.msk [vmem:[#allocation2 + $0x10] sm:$0xff] %vm1059, 0.0
      %1064 = vst.msk [vmem:[#allocation2 + $0x18] sm:$0x3] %vm1061, 0.0
      %1065 = vst.msk [vmem:[#allocation2 + $0x20] sm:$0xff] %vm1059, 0.0
      %1066 = vst.msk [vmem:[#allocation2 + $0x28] sm:$0x3] %vm1061, 0.0
      %1067 = vst.msk [vmem:[#allocation2 + $0x30] sm:$0xff] %vm1059, 0.0
      %1068 = vst.msk [vmem:[#allocation2 + $0x38] sm:$0x3] %vm1061, 0.0
      %1069 = vst.msk [vmem:[#allocation2 + $0x40] sm:$0xff] %vm1059, 0.0
      %1070 = vst.msk [vmem:[#allocation2 + $0x48] sm:$0x3] %vm1061, 0.0
      %1071 = vst.msk [vmem:[#allocation2 + $0x50] sm:$0xff] %vm1059, 0.0
      %1072 = vst.msk [vmem:[#allocation2 + $0x58] sm:$0x3] %vm1061, 0.0
      %1073 = vst.msk [vmem:[#allocation2 + $0x60] sm:$0xff] %vm1059, 0.0
      %1074 = vst.msk [vmem:[#allocation2 + $0x68] sm:$0x3] %vm1061, 0.0
      %1075 = vst.msk [vmem:[#allocation2 + $0x70] sm:$0xff] %vm1059, 0.0
      %1076 = vst.msk [vmem:[#allocation2 + $0x78] sm:$0x3] %vm1061, 0.0
      %1077 = vst.msk [vmem:[#allocation2 + $0x80] sm:$0xff] %vm1059, 0.0
      %1078 = vst.msk [vmem:[#allocation2 + $0x88] sm:$0x3] %vm1061, 0.0
      %1079 = vst.msk [vmem:[#allocation2 + $0x90] sm:$0xff] %vm1059, 0.0
      %1080 = vst.msk [vmem:[#allocation2 + $0x98] sm:$0x3] %vm1061, 0.0
      %s1081 = scalar_lea.vmem [#allocation2], 16
      %1082 = vst.msk [vmem:[%s1081 + $0x1] sm:$0xff] %vm1059, %v1051
      %1083 = vst.msk [vmem:[%s1081 + $0x11] sm:$0xff] %vm1059, %v1052
      %1084 = vst.msk [vmem:[%s1081 + $0x21] sm:$0xff] %vm1059, %v1053
      %1085 = vst.msk [vmem:[%s1081 + $0x31] sm:$0xff] %vm1059, %v1054
      %1086 = vst.msk [vmem:[%s1081 + $0x41] sm:$0xff] %vm1059, %v1055
      %1087 = vst.msk [vmem:[%s1081 + $0x51] sm:$0xff] %vm1059, %v1056
      %1088 = vst.msk [vmem:[%s1081 + $0x61] sm:$0xff] %vm1059, %v1057
      %1089 = vst.msk [vmem:[%s1081 + $0x71] sm:$0xff] %vm1059, %v1058
      %v1090 = vld [vmem:[#allocation2] sm:$0xff]
      %v1091 = vld [vmem:[#allocation2 + $0x10] sm:$0xff]
      %v1092 = vld [vmem:[#allocation2 + $0x20] sm:$0xff]
      %v1093 = vld [vmem:[#allocation2 + $0x30] sm:$0xff]
      %v1094 = vld [vmem:[#allocation2 + $0x40] sm:$0xff]
      %v1095 = vld [vmem:[#allocation2 + $0x50] sm:$0xff]
      %v1096 = vld [vmem:[#allocation2 + $0x60] sm:$0xff]
      %v1097 = vld [vmem:[#allocation2 + $0x70] sm:$0xff]
      %v1098 = vld [vmem:[%s3] sm:$0xff]
      %v1099 = vld [vmem:[#allocation2 + $0x1] sm:$0xff]
      %v1100 = vld [vmem:[#allocation2 + $0x11] sm:$0xff]
      %v1101 = vld [vmem:[#allocation2 + $0x21] sm:$0xff]
      %v1102 = vld [vmem:[#allocation2 + $0x31] sm:$0xff]
      %v1103 = vld [vmem:[#allocation2 + $0x41] sm:$0xff]
      %v1104 = vld [vmem:[#allocation2 + $0x51] sm:$0xff]
      %v1105 = vld [vmem:[#allocation2 + $0x61] sm:$0xff]
      %v1106 = vld [vmem:[#allocation2 + $0x71] sm:$0xff]
      %s1107 = scalar_lea.vmem %s3, 8
      %v1108 = vld [vmem:[%s1107] sm:$0xff]
      %v1110 = vsel %vm1059, %v1099, 0
      %v1113 = vsel %vm1059, %v1100, 0
      %v1116 = vsel %vm1059, %v1101, 0
      %v1119 = vsel %vm1059, %v1102, 0
      %v1122 = vsel %vm1059, %v1103, 0
      %v1125 = vsel %vm1059, %v1104, 0
      %v1128 = vsel %vm1059, %v1105, 0
      %v1131 = vsel %vm1059, %v1106, 0
      %1133 = vmatpush.msra.mxu0 0.0
      %1134 = vmatpush.msra.mxu0 0.0
      %1135 = vmatpush.msra.mxu0 0.0
      %1136 = vmatpush.msra.mxu0 0.0
      %1137 = vmatpush.msra.mxu0 0.0
      %1138 = vmatpush.msra.mxu0 0.0
      %1139 = vmatpush.msra.mxu0 0.0
      %1140 = vmatpush.msra.mxu0 0.0
      %1141 = vmatpush.msra.mxu0 0.0
      %1142 = vmatpush.msra.mxu0 0.0
      %1143 = vmatpush.msra.mxu0 0.0
      %1144 = vmatpush.msra.mxu0 0.0
      %1145 = vmatpush.msra.mxu0 0.0
      %1146 = vmatpush.msra.mxu0 0.0
      %1147 = vmatpush.msra.mxu0 0.0
      %1148 = vmatpush.msra.mxu0 %v1108
      %1149 = vmatmul.f32.gmra.mxu0 %v1110
      %v1150 = vpop.f32.mrf.mxu0
      %v1151 = vadd.f32 0.0, %v1150
      %1152 = vmatmul.f32.gmra.mxu0 %v1113
      %v1153 = vpop.f32.mrf.mxu0
      %v1154 = vadd.f32 0.0, %v1153
      %1155 = vmatmul.f32.gmra.mxu0 %v1116
      %v1156 = vpop.f32.mrf.mxu0
      %v1157 = vadd.f32 0.0, %v1156
      %1158 = vmatmul.f32.gmra.mxu0 %v1119
      %v1159 = vpop.f32.mrf.mxu0
      %v1160 = vadd.f32 0.0, %v1159
      %1161 = vmatmul.f32.gmra.mxu0 %v1122
      %v1162 = vpop.f32.mrf.mxu0
      %v1163 = vadd.f32 0.0, %v1162
      %1164 = vmatmul.f32.gmra.mxu0 %v1125
      %v1165 = vpop.f32.mrf.mxu0
      %v1166 = vadd.f32 0.0, %v1165
      %1167 = vmatmul.f32.gmra.mxu0 %v1128
      %v1168 = vpop.f32.mrf.mxu0
      %v1169 = vadd.f32 0.0, %v1168
      %1170 = vmatmul.f32.gmra.mxu0 %v1131
      %v1171 = vpop.f32.mrf.mxu0
      %v1172 = vadd.f32 0.0, %v1171
      %1173 = vdwg.mxu0
      %v1175 = vsel %vm1059, %v1090, 0
      %v1178 = vsel %vm1059, %v1091, 0
      %v1181 = vsel %vm1059, %v1092, 0
      %v1184 = vsel %vm1059, %v1093, 0
      %v1187 = vsel %vm1059, %v1094, 0
      %v1190 = vsel %vm1059, %v1095, 0
      %v1193 = vsel %vm1059, %v1096, 0
      %v1196 = vsel %vm1059, %v1097, 0
      %1198 = vmatpush.msra.mxu0 0.0
      %1199 = vmatpush.msra.mxu0 0.0
      %1200 = vmatpush.msra.mxu0 0.0
      %1201 = vmatpush.msra.mxu0 0.0
      %1202 = vmatpush.msra.mxu0 0.0
      %1203 = vmatpush.msra.mxu0 0.0
      %1204 = vmatpush.msra.mxu0 0.0
      %1205 = vmatpush.msra.mxu0 0.0
      %1206 = vmatpush.msra.mxu0 0.0
      %1207 = vmatpush.msra.mxu0 0.0
      %1208 = vmatpush.msra.mxu0 0.0
      %1209 = vmatpush.msra.mxu0 0.0
      %1210 = vmatpush.msra.mxu0 0.0
      %1211 = vmatpush.msra.mxu0 0.0
      %1212 = vmatpush.msra.mxu0 0.0
      %1213 = vmatpush.msra.mxu0 %v1098
      %1214 = vmatmul.f32.gmra.mxu0 %v1175
      %v1215 = vpop.f32.mrf.mxu0
      %v1216 = vadd.f32 %v1151, %v1215
      %1217 = vmatmul.f32.gmra.mxu0 %v1178
      %v1218 = vpop.f32.mrf.mxu0
      %v1219 = vadd.f32 %v1154, %v1218
      %1220 = vmatmul.f32.gmra.mxu0 %v1181
      %v1221 = vpop.f32.mrf.mxu0
      %v1222 = vadd.f32 %v1157, %v1221
      %1223 = vmatmul.f32.gmra.mxu0 %v1184
      %v1224 = vpop.f32.mrf.mxu0
      %v1225 = vadd.f32 %v1160, %v1224
      %1226 = vmatmul.f32.gmra.mxu0 %v1187
      %v1227 = vpop.f32.mrf.mxu0
      %v1228 = vadd.f32 %v1163, %v1227
      %1229 = vmatmul.f32.gmra.mxu0 %v1190
      %v1230 = vpop.f32.mrf.mxu0
      %v1231 = vadd.f32 %v1166, %v1230
      %1232 = vmatmul.f32.gmra.mxu0 %v1193
      %v1233 = vpop.f32.mrf.mxu0
      %v1234 = vadd.f32 %v1169, %v1233
      %1235 = vmatmul.f32.gmra.mxu0 %v1196
      %v1236 = vpop.f32.mrf.mxu0
      %v1237 = vadd.f32 %v1172, %v1236
      %1238 = vdwg.mxu0
      %v1239 = vld [vmem:[#allocation2 + $0x2] sm:$0xff]
      %v1240 = vld [vmem:[#allocation2 + $0x12] sm:$0xff]
      %v1241 = vld [vmem:[#allocation2 + $0x22] sm:$0xff]
      %v1242 = vld [vmem:[#allocation2 + $0x32] sm:$0xff]
      %v1243 = vld [vmem:[#allocation2 + $0x42] sm:$0xff]
      %v1244 = vld [vmem:[#allocation2 + $0x52] sm:$0xff]
      %v1245 = vld [vmem:[#allocation2 + $0x62] sm:$0xff]
      %v1246 = vld [vmem:[#allocation2 + $0x72] sm:$0xff]
      %s1247 = scalar_lea.vmem %s3, 16
      %v1248 = vld [vmem:[%s1247] sm:$0xff]
      %v1250 = vsel %vm1059, %v1239, 0
      %v1253 = vsel %vm1059, %v1240, 0
      %v1256 = vsel %vm1059, %v1241, 0
      %v1259 = vsel %vm1059, %v1242, 0
      %v1262 = vsel %vm1059, %v1243, 0
      %v1265 = vsel %vm1059, %v1244, 0
      %v1268 = vsel %vm1059, %v1245, 0
      %v1271 = vsel %vm1059, %v1246, 0
      %1273 = vmatpush.msra.mxu0 0.0
      %1274 = vmatpush.msra.mxu0 0.0
      %1275 = vmatpush.msra.mxu0 0.0
      %1276 = vmatpush.msra.mxu0 0.0
      %1277 = vmatpush.msra.mxu0 0.0
      %1278 = vmatpush.msra.mxu0 0.0
      %1279 = vmatpush.msra.mxu0 0.0
      %1280 = vmatpush.msra.mxu0 0.0
      %1281 = vmatpush.msra.mxu0 0.0
      %1282 = vmatpush.msra.mxu0 0.0
      %1283 = vmatpush.msra.mxu0 0.0
      %1284 = vmatpush.msra.mxu0 0.0
      %1285 = vmatpush.msra.mxu0 0.0
      %1286 = vmatpush.msra.mxu0 0.0
      %1287 = vmatpush.msra.mxu0 0.0
      %1288 = vmatpush.msra.mxu0 %v1248
      %1289 = vmatmul.f32.gmra.mxu0 %v1250
      %v1290 = vpop.f32.mrf.mxu0
      %v1291 = vadd.f32 0.0, %v1290
      %1292 = vmatmul.f32.gmra.mxu0 %v1253
      %v1293 = vpop.f32.mrf.mxu0
      %v1294 = vadd.f32 0.0, %v1293
      %1295 = vmatmul.f32.gmra.mxu0 %v1256
      %v1296 = vpop.f32.mrf.mxu0
      %v1297 = vadd.f32 0.0, %v1296
      %1298 = vmatmul.f32.gmra.mxu0 %v1259
      %v1299 = vpop.f32.mrf.mxu0
      %v1300 = vadd.f32 0.0, %v1299
      %1301 = vmatmul.f32.gmra.mxu0 %v1262
      %v1302 = vpop.f32.mrf.mxu0
      %v1303 = vadd.f32 0.0, %v1302
      %1304 = vmatmul.f32.gmra.mxu0 %v1265
      %v1305 = vpop.f32.mrf.mxu0
      %v1306 = vadd.f32 0.0, %v1305
      %1307 = vmatmul.f32.gmra.mxu0 %v1268
      %v1308 = vpop.f32.mrf.mxu0
      %v1309 = vadd.f32 0.0, %v1308
      %1310 = vmatmul.f32.gmra.mxu0 %v1271
      %v1311 = vpop.f32.mrf.mxu0
      %v1312 = vadd.f32 0.0, %v1311
      %1313 = vdwg.mxu0
      %v1314 = vadd.f32 %v1216, %v1291
      %v1315 = vadd.f32 %v1219, %v1294
      %v1316 = vadd.f32 %v1222, %v1297
      %v1317 = vadd.f32 %v1225, %v1300
      %v1318 = vadd.f32 %v1228, %v1303
      %v1319 = vadd.f32 %v1231, %v1306
      %v1320 = vadd.f32 %v1234, %v1309
      %v1321 = vadd.f32 %v1237, %v1312
      %v1322 = vld [vmem:[%s1081] sm:$0xff]
      %v1323 = vld [vmem:[%s1081 + $0x10] sm:$0xff]
      %v1324 = vld [vmem:[%s1081 + $0x20] sm:$0xff]
      %v1325 = vld [vmem:[%s1081 + $0x30] sm:$0xff]
      %v1326 = vld [vmem:[%s1081 + $0x40] sm:$0xff]
      %v1327 = vld [vmem:[%s1081 + $0x50] sm:$0xff]
      %v1328 = vld [vmem:[%s1081 + $0x60] sm:$0xff]
      %v1329 = vld [vmem:[%s1081 + $0x70] sm:$0xff]
      %s1330 = scalar_lea.vmem %s3, 24
      %v1331 = vld [vmem:[%s1330] sm:$0xff]
      %v1333 = vsel %vm1059, %v1322, 0
      %v1336 = vsel %vm1059, %v1323, 0
      %v1339 = vsel %vm1059, %v1324, 0
      %v1342 = vsel %vm1059, %v1325, 0
      %v1345 = vsel %vm1059, %v1326, 0
      %v1348 = vsel %vm1059, %v1327, 0
      %v1351 = vsel %vm1059, %v1328, 0
      %v1354 = vsel %vm1059, %v1329, 0
      %1356 = vmatpush.msra.mxu0 0.0
      %1357 = vmatpush.msra.mxu0 0.0
      %1358 = vmatpush.msra.mxu0 0.0
      %1359 = vmatpush.msra.mxu0 0.0
      %1360 = vmatpush.msra.mxu0 0.0
      %1361 = vmatpush.msra.mxu0 0.0
      %1362 = vmatpush.msra.mxu0 0.0
      %1363 = vmatpush.msra.mxu0 0.0
      %1364 = vmatpush.msra.mxu0 0.0
      %1365 = vmatpush.msra.mxu0 0.0
      %1366 = vmatpush.msra.mxu0 0.0
      %1367 = vmatpush.msra.mxu0 0.0
      %1368 = vmatpush.msra.mxu0 0.0
      %1369 = vmatpush.msra.mxu0 0.0
      %1370 = vmatpush.msra.mxu0 0.0
      %1371 = vmatpush.msra.mxu0 %v1331
      %1372 = vmatmul.f32.gmra.mxu0 %v1333
      %v1373 = vpop.f32.mrf.mxu0
      %v1374 = vadd.f32 0.0, %v1373
      %1375 = vmatmul.f32.gmra.mxu0 %v1336
      %v1376 = vpop.f32.mrf.mxu0
      %v1377 = vadd.f32 0.0, %v1376
      %1378 = vmatmul.f32.gmra.mxu0 %v1339
      %v1379 = vpop.f32.mrf.mxu0
      %v1380 = vadd.f32 0.0, %v1379
      %1381 = vmatmul.f32.gmra.mxu0 %v1342
      %v1382 = vpop.f32.mrf.mxu0
      %v1383 = vadd.f32 0.0, %v1382
      %1384 = vmatmul.f32.gmra.mxu0 %v1345
      %v1385 = vpop.f32.mrf.mxu0
      %v1386 = vadd.f32 0.0, %v1385
      %1387 = vmatmul.f32.gmra.mxu0 %v1348
      %v1388 = vpop.f32.mrf.mxu0
      %v1389 = vadd.f32 0.0, %v1388
      %1390 = vmatmul.f32.gmra.mxu0 %v1351
      %v1391 = vpop.f32.mrf.mxu0
      %v1392 = vadd.f32 0.0, %v1391
      %1393 = vmatmul.f32.gmra.mxu0 %v1354
      %v1394 = vpop.f32.mrf.mxu0
      %v1395 = vadd.f32 0.0, %v1394
      %1396 = vdwg.mxu0
      %v1397 = vadd.f32 %v1314, %v1374
      %v1398 = vadd.f32 %v1315, %v1377
      %v1399 = vadd.f32 %v1316, %v1380
      %v1400 = vadd.f32 %v1317, %v1383
      %v1401 = vadd.f32 %v1318, %v1386
      %v1402 = vadd.f32 %v1319, %v1389
      %v1403 = vadd.f32 %v1320, %v1392
      %v1404 = vadd.f32 %v1321, %v1395
      %v1405 = vld [vmem:[%s1081 + $0x1] sm:$0xff]
      %v1406 = vld [vmem:[%s1081 + $0x11] sm:$0xff]
      %v1407 = vld [vmem:[%s1081 + $0x21] sm:$0xff]
      %v1408 = vld [vmem:[%s1081 + $0x31] sm:$0xff]
      %v1409 = vld [vmem:[%s1081 + $0x41] sm:$0xff]
      %v1410 = vld [vmem:[%s1081 + $0x51] sm:$0xff]
      %v1411 = vld [vmem:[%s1081 + $0x61] sm:$0xff]
      %v1412 = vld [vmem:[%s1081 + $0x71] sm:$0xff]
      %s1413 = scalar_lea.vmem %s3, 32
      %v1414 = vld [vmem:[%s1413] sm:$0xff]
      %v1416 = vsel %vm1059, %v1405, 0
      %v1419 = vsel %vm1059, %v1406, 0
      %v1422 = vsel %vm1059, %v1407, 0
      %v1425 = vsel %vm1059, %v1408, 0
      %v1428 = vsel %vm1059, %v1409, 0
      %v1431 = vsel %vm1059, %v1410, 0
      %v1434 = vsel %vm1059, %v1411, 0
      %v1437 = vsel %vm1059, %v1412, 0
      %1439 = vmatpush.msra.mxu0 0.0
      %1440 = vmatpush.msra.mxu0 0.0
      %1441 = vmatpush.msra.mxu0 0.0
      %1442 = vmatpush.msra.mxu0 0.0
      %1443 = vmatpush.msra.mxu0 0.0
      %1444 = vmatpush.msra.mxu0 0.0
      %1445 = vmatpush.msra.mxu0 0.0
      %1446 = vmatpush.msra.mxu0 0.0
      %1447 = vmatpush.msra.mxu0 0.0
      %1448 = vmatpush.msra.mxu0 0.0
      %1449 = vmatpush.msra.mxu0 0.0
      %1450 = vmatpush.msra.mxu0 0.0
      %1451 = vmatpush.msra.mxu0 0.0
      %1452 = vmatpush.msra.mxu0 0.0
      %1453 = vmatpush.msra.mxu0 0.0
      %1454 = vmatpush.msra.mxu0 %v1414
      %1455 = vmatmul.f32.gmra.mxu0 %v1416
      %v1456 = vpop.f32.mrf.mxu0
      %v1457 = vadd.f32 0.0, %v1456
      %1458 = vmatmul.f32.gmra.mxu0 %v1419
      %v1459 = vpop.f32.mrf.mxu0
      %v1460 = vadd.f32 0.0, %v1459
      %1461 = vmatmul.f32.gmra.mxu0 %v1422
      %v1462 = vpop.f32.mrf.mxu0
      %v1463 = vadd.f32 0.0, %v1462
      %1464 = vmatmul.f32.gmra.mxu0 %v1425
      %v1465 = vpop.f32.mrf.mxu0
      %v1466 = vadd.f32 0.0, %v1465
      %1467 = vmatmul.f32.gmra.mxu0 %v1428
      %v1468 = vpop.f32.mrf.mxu0
      %v1469 = vadd.f32 0.0, %v1468
      %1470 = vmatmul.f32.gmra.mxu0 %v1431
      %v1471 = vpop.f32.mrf.mxu0
      %v1472 = vadd.f32 0.0, %v1471
      %1473 = vmatmul.f32.gmra.mxu0 %v1434
      %v1474 = vpop.f32.mrf.mxu0
      %v1475 = vadd.f32 0.0, %v1474
      %1476 = vmatmul.f32.gmra.mxu0 %v1437
      %v1477 = vpop.f32.mrf.mxu0
      %v1478 = vadd.f32 0.0, %v1477
      %1479 = vdwg.mxu0
      %v1480 = vadd.f32 %v1397, %v1457
      %v1481 = vadd.f32 %v1398, %v1460
      %v1482 = vadd.f32 %v1399, %v1463
      %v1483 = vadd.f32 %v1400, %v1466
      %v1484 = vadd.f32 %v1401, %v1469
      %v1485 = vadd.f32 %v1402, %v1472
      %v1486 = vadd.f32 %v1403, %v1475
      %v1487 = vadd.f32 %v1404, %v1478
      %v1488 = vld [vmem:[%s1081 + $0x2] sm:$0xff]
      %v1489 = vld [vmem:[%s1081 + $0x12] sm:$0xff]
      %v1490 = vld [vmem:[%s1081 + $0x22] sm:$0xff]
      %v1491 = vld [vmem:[%s1081 + $0x32] sm:$0xff]
      %v1492 = vld [vmem:[%s1081 + $0x42] sm:$0xff]
      %v1493 = vld [vmem:[%s1081 + $0x52] sm:$0xff]
      %v1494 = vld [vmem:[%s1081 + $0x62] sm:$0xff]
      %v1495 = vld [vmem:[%s1081 + $0x72] sm:$0xff]
      %s1496 = scalar_lea.vmem %s3, 40
      %v1497 = vld [vmem:[%s1496] sm:$0xff]
      %v1499 = vsel %vm1059, %v1488, 0
      %v1502 = vsel %vm1059, %v1489, 0
      %v1505 = vsel %vm1059, %v1490, 0
      %v1508 = vsel %vm1059, %v1491, 0
      %v1511 = vsel %vm1059, %v1492, 0
      %v1514 = vsel %vm1059, %v1493, 0
      %v1517 = vsel %vm1059, %v1494, 0
      %v1520 = vsel %vm1059, %v1495, 0
      %1522 = vmatpush.msra.mxu0 0.0
      %1523 = vmatpush.msra.mxu0 0.0
      %1524 = vmatpush.msra.mxu0 0.0
      %1525 = vmatpush.msra.mxu0 0.0
      %1526 = vmatpush.msra.mxu0 0.0
      %1527 = vmatpush.msra.mxu0 0.0
      %1528 = vmatpush.msra.mxu0 0.0
      %1529 = vmatpush.msra.mxu0 0.0
      %1530 = vmatpush.msra.mxu0 0.0
      %1531 = vmatpush.msra.mxu0 0.0
      %1532 = vmatpush.msra.mxu0 0.0
      %1533 = vmatpush.msra.mxu0 0.0
      %1534 = vmatpush.msra.mxu0 0.0
      %1535 = vmatpush.msra.mxu0 0.0
      %1536 = vmatpush.msra.mxu0 0.0
      %1537 = vmatpush.msra.mxu0 %v1497
      %1538 = vmatmul.f32.gmra.mxu0 %v1499
      %v1539 = vpop.f32.mrf.mxu0
      %v1540 = vadd.f32 0.0, %v1539
      %1541 = vmatmul.f32.gmra.mxu0 %v1502
      %v1542 = vpop.f32.mrf.mxu0
      %v1543 = vadd.f32 0.0, %v1542
      %1544 = vmatmul.f32.gmra.mxu0 %v1505
      %v1545 = vpop.f32.mrf.mxu0
      %v1546 = vadd.f32 0.0, %v1545
      %1547 = vmatmul.f32.gmra.mxu0 %v1508
      %v1548 = vpop.f32.mrf.mxu0
      %v1549 = vadd.f32 0.0, %v1548
      %1550 = vmatmul.f32.gmra.mxu0 %v1511
      %v1551 = vpop.f32.mrf.mxu0
      %v1552 = vadd.f32 0.0, %v1551
      %1553 = vmatmul.f32.gmra.mxu0 %v1514
      %v1554 = vpop.f32.mrf.mxu0
      %v1555 = vadd.f32 0.0, %v1554
      %1556 = vmatmul.f32.gmra.mxu0 %v1517
      %v1557 = vpop.f32.mrf.mxu0
      %v1558 = vadd.f32 0.0, %v1557
      %1559 = vmatmul.f32.gmra.mxu0 %v1520
      %v1560 = vpop.f32.mrf.mxu0
      %v1561 = vadd.f32 0.0, %v1560
      %1562 = vdwg.mxu0
      %v1563 = vadd.f32 %v1480, %v1540
      %v1564 = vadd.f32 %v1481, %v1543
      %v1565 = vadd.f32 %v1482, %v1546
      %v1566 = vadd.f32 %v1483, %v1549
      %v1567 = vadd.f32 %v1484, %v1552
      %v1568 = vadd.f32 %v1485, %v1555
      %v1569 = vadd.f32 %v1486, %v1558
      %v1570 = vadd.f32 %v1487, %v1561
      %s1571 = scalar_lea.vmem [#allocation2], 32
      %v1572 = vld [vmem:[%s1571] sm:$0xff]
      %v1573 = vld [vmem:[%s1571 + $0x10] sm:$0xff]
      %v1574 = vld [vmem:[%s1571 + $0x20] sm:$0xff]
      %v1575 = vld [vmem:[%s1571 + $0x30] sm:$0xff]
      %v1576 = vld [vmem:[%s1571 + $0x40] sm:$0xff]
      %v1577 = vld [vmem:[%s1571 + $0x50] sm:$0xff]
      %v1578 = vld [vmem:[%s1571 + $0x60] sm:$0xff]
      %v1579 = vld [vmem:[%s1571 + $0x70] sm:$0xff]
      %s1580 = scalar_lea.vmem %s3, 48
      %v1581 = vld [vmem:[%s1580] sm:$0xff]
      %v1583 = vsel %vm1059, %v1572, 0
      %v1586 = vsel %vm1059, %v1573, 0
      %v1589 = vsel %vm1059, %v1574, 0
      %v1592 = vsel %vm1059, %v1575, 0
      %v1595 = vsel %vm1059, %v1576, 0
      %v1598 = vsel %vm1059, %v1577, 0
      %v1601 = vsel %vm1059, %v1578, 0
      %v1604 = vsel %vm1059, %v1579, 0
      %1606 = vmatpush.msra.mxu0 0.0
      %1607 = vmatpush.msra.mxu0 0.0
      %1608 = vmatpush.msra.mxu0 0.0
      %1609 = vmatpush.msra.mxu0 0.0
      %1610 = vmatpush.msra.mxu0 0.0
      %1611 = vmatpush.msra.mxu0 0.0
      %1612 = vmatpush.msra.mxu0 0.0
      %1613 = vmatpush.msra.mxu0 0.0
      %1614 = vmatpush.msra.mxu0 0.0
      %1615 = vmatpush.msra.mxu0 0.0
      %1616 = vmatpush.msra.mxu0 0.0
      %1617 = vmatpush.msra.mxu0 0.0
      %1618 = vmatpush.msra.mxu0 0.0
      %1619 = vmatpush.msra.mxu0 0.0
      %1620 = vmatpush.msra.mxu0 0.0
      %1621 = vmatpush.msra.mxu0 %v1581
      %1622 = vmatmul.f32.gmra.mxu0 %v1583
      %v1623 = vpop.f32.mrf.mxu0
      %v1624 = vadd.f32 0.0, %v1623
      %1625 = vmatmul.f32.gmra.mxu0 %v1586
      %v1626 = vpop.f32.mrf.mxu0
      %v1627 = vadd.f32 0.0, %v1626
      %1628 = vmatmul.f32.gmra.mxu0 %v1589
      %v1629 = vpop.f32.mrf.mxu0
      %v1630 = vadd.f32 0.0, %v1629
      %1631 = vmatmul.f32.gmra.mxu0 %v1592
      %v1632 = vpop.f32.mrf.mxu0
      %v1633 = vadd.f32 0.0, %v1632
      %1634 = vmatmul.f32.gmra.mxu0 %v1595
      %v1635 = vpop.f32.mrf.mxu0
      %v1636 = vadd.f32 0.0, %v1635
      %1637 = vmatmul.f32.gmra.mxu0 %v1598
      %v1638 = vpop.f32.mrf.mxu0
      %v1639 = vadd.f32 0.0, %v1638
      %1640 = vmatmul.f32.gmra.mxu0 %v1601
      %v1641 = vpop.f32.mrf.mxu0
      %v1642 = vadd.f32 0.0, %v1641
      %1643 = vmatmul.f32.gmra.mxu0 %v1604
      %v1644 = vpop.f32.mrf.mxu0
      %v1645 = vadd.f32 0.0, %v1644
      %1646 = vdwg.mxu0
      %v1647 = vadd.f32 %v1563, %v1624
      %v1648 = vadd.f32 %v1564, %v1627
      %v1649 = vadd.f32 %v1565, %v1630
      %v1650 = vadd.f32 %v1566, %v1633
      %v1651 = vadd.f32 %v1567, %v1636
      %v1652 = vadd.f32 %v1568, %v1639
      %v1653 = vadd.f32 %v1569, %v1642
      %v1654 = vadd.f32 %v1570, %v1645
      %v1655 = vld [vmem:[%s1571 + $0x1] sm:$0xff]
      %v1656 = vld [vmem:[%s1571 + $0x11] sm:$0xff]
      %v1657 = vld [vmem:[%s1571 + $0x21] sm:$0xff]
      %v1658 = vld [vmem:[%s1571 + $0x31] sm:$0xff]
      %v1659 = vld [vmem:[%s1571 + $0x41] sm:$0xff]
      %v1660 = vld [vmem:[%s1571 + $0x51] sm:$0xff]
      %v1661 = vld [vmem:[%s1571 + $0x61] sm:$0xff]
      %v1662 = vld [vmem:[%s1571 + $0x71] sm:$0xff]
      %s1663 = scalar_lea.vmem %s3, 56
      %v1664 = vld [vmem:[%s1663] sm:$0xff]
      %v1666 = vsel %vm1059, %v1655, 0
      %v1669 = vsel %vm1059, %v1656, 0
      %v1672 = vsel %vm1059, %v1657, 0
      %v1675 = vsel %vm1059, %v1658, 0
      %v1678 = vsel %vm1059, %v1659, 0
      %v1681 = vsel %vm1059, %v1660, 0
      %v1684 = vsel %vm1059, %v1661, 0
      %v1687 = vsel %vm1059, %v1662, 0
      %1689 = vmatpush.msra.mxu0 0.0
      %1690 = vmatpush.msra.mxu0 0.0
      %1691 = vmatpush.msra.mxu0 0.0
      %1692 = vmatpush.msra.mxu0 0.0
      %1693 = vmatpush.msra.mxu0 0.0
      %1694 = vmatpush.msra.mxu0 0.0
      %1695 = vmatpush.msra.mxu0 0.0
      %1696 = vmatpush.msra.mxu0 0.0
      %1697 = vmatpush.msra.mxu0 0.0
      %1698 = vmatpush.msra.mxu0 0.0
      %1699 = vmatpush.msra.mxu0 0.0
      %1700 = vmatpush.msra.mxu0 0.0
      %1701 = vmatpush.msra.mxu0 0.0
      %1702 = vmatpush.msra.mxu0 0.0
      %1703 = vmatpush.msra.mxu0 0.0
      %1704 = vmatpush.msra.mxu0 %v1664
      %1705 = vmatmul.f32.gmra.mxu0 %v1666
      %v1706 = vpop.f32.mrf.mxu0
      %v1707 = vadd.f32 0.0, %v1706
      %1708 = vmatmul.f32.gmra.mxu0 %v1669
      %v1709 = vpop.f32.mrf.mxu0
      %v1710 = vadd.f32 0.0, %v1709
      %1711 = vmatmul.f32.gmra.mxu0 %v1672
      %v1712 = vpop.f32.mrf.mxu0
      %v1713 = vadd.f32 0.0, %v1712
      %1714 = vmatmul.f32.gmra.mxu0 %v1675
      %v1715 = vpop.f32.mrf.mxu0
      %v1716 = vadd.f32 0.0, %v1715
      %1717 = vmatmul.f32.gmra.mxu0 %v1678
      %v1718 = vpop.f32.mrf.mxu0
      %v1719 = vadd.f32 0.0, %v1718
      %1720 = vmatmul.f32.gmra.mxu0 %v1681
      %v1721 = vpop.f32.mrf.mxu0
      %v1722 = vadd.f32 0.0, %v1721
      %1723 = vmatmul.f32.gmra.mxu0 %v1684
      %v1724 = vpop.f32.mrf.mxu0
      %v1725 = vadd.f32 0.0, %v1724
      %1726 = vmatmul.f32.gmra.mxu0 %v1687
      %v1727 = vpop.f32.mrf.mxu0
      %v1728 = vadd.f32 0.0, %v1727
      %1729 = vdwg.mxu0
      %v1730 = vadd.f32 %v1647, %v1707
      %v1731 = vadd.f32 %v1648, %v1710
      %v1732 = vadd.f32 %v1649, %v1713
      %v1733 = vadd.f32 %v1650, %v1716
      %v1734 = vadd.f32 %v1651, %v1719
      %v1735 = vadd.f32 %v1652, %v1722
      %v1736 = vadd.f32 %v1653, %v1725
      %v1737 = vadd.f32 %v1654, %v1728
      %v1738 = vld [vmem:[%s1571 + $0x2] sm:$0xff]
      %v1739 = vld [vmem:[%s1571 + $0x12] sm:$0xff]
      %v1740 = vld [vmem:[%s1571 + $0x22] sm:$0xff]
      %v1741 = vld [vmem:[%s1571 + $0x32] sm:$0xff]
      %v1742 = vld [vmem:[%s1571 + $0x42] sm:$0xff]
      %v1743 = vld [vmem:[%s1571 + $0x52] sm:$0xff]
      %v1744 = vld [vmem:[%s1571 + $0x62] sm:$0xff]
      %v1745 = vld [vmem:[%s1571 + $0x72] sm:$0xff]
      %s1746 = scalar_lea.vmem %s3, 64
      %v1747 = vld [vmem:[%s1746] sm:$0xff]
      %v1749 = vsel %vm1059, %v1738, 0
      %v1752 = vsel %vm1059, %v1739, 0
      %v1755 = vsel %vm1059, %v1740, 0
      %v1758 = vsel %vm1059, %v1741, 0
      %v1761 = vsel %vm1059, %v1742, 0
      %v1764 = vsel %vm1059, %v1743, 0
      %v1767 = vsel %vm1059, %v1744, 0
      %v1770 = vsel %vm1059, %v1745, 0
      %1772 = vmatpush.msra.mxu0 0.0
      %1773 = vmatpush.msra.mxu0 0.0
      %1774 = vmatpush.msra.mxu0 0.0
      %1775 = vmatpush.msra.mxu0 0.0
      %1776 = vmatpush.msra.mxu0 0.0
      %1777 = vmatpush.msra.mxu0 0.0
      %1778 = vmatpush.msra.mxu0 0.0
      %1779 = vmatpush.msra.mxu0 0.0
      %1780 = vmatpush.msra.mxu0 0.0
      %1781 = vmatpush.msra.mxu0 0.0
      %1782 = vmatpush.msra.mxu0 0.0
      %1783 = vmatpush.msra.mxu0 0.0
      %1784 = vmatpush.msra.mxu0 0.0
      %1785 = vmatpush.msra.mxu0 0.0
      %1786 = vmatpush.msra.mxu0 0.0
      %1787 = vmatpush.msra.mxu0 %v1747
      %1788 = vmatmul.f32.gmra.mxu0 %v1749
      %v1789 = vpop.f32.mrf.mxu0
      %v1790 = vadd.f32 0.0, %v1789
      %1791 = vmatmul.f32.gmra.mxu0 %v1752
      %v1792 = vpop.f32.mrf.mxu0
      %v1793 = vadd.f32 0.0, %v1792
      %1794 = vmatmul.f32.gmra.mxu0 %v1755
      %v1795 = vpop.f32.mrf.mxu0
      %v1796 = vadd.f32 0.0, %v1795
      %1797 = vmatmul.f32.gmra.mxu0 %v1758
      %v1798 = vpop.f32.mrf.mxu0
      %v1799 = vadd.f32 0.0, %v1798
      %1800 = vmatmul.f32.gmra.mxu0 %v1761
      %v1801 = vpop.f32.mrf.mxu0
      %v1802 = vadd.f32 0.0, %v1801
      %1803 = vmatmul.f32.gmra.mxu0 %v1764
      %v1804 = vpop.f32.mrf.mxu0
      %v1805 = vadd.f32 0.0, %v1804
      %1806 = vmatmul.f32.gmra.mxu0 %v1767
      %v1807 = vpop.f32.mrf.mxu0
      %v1808 = vadd.f32 0.0, %v1807
      %1809 = vmatmul.f32.gmra.mxu0 %v1770
      %v1810 = vpop.f32.mrf.mxu0
      %v1811 = vadd.f32 0.0, %v1810
      %1812 = vdwg.mxu0
      %v1813 = vadd.f32 %v1730, %v1790
      %v1814 = vadd.f32 %v1731, %v1793
      %v1815 = vadd.f32 %v1732, %v1796
      %v1816 = vadd.f32 %v1733, %v1799
      %v1817 = vadd.f32 %v1734, %v1802
      %v1818 = vadd.f32 %v1735, %v1805
      %v1819 = vadd.f32 %v1736, %v1808
      %v1820 = vadd.f32 %v1737, %v1811
      %v1821 = vld [vmem:[%s4] sm:$0x1]
      %v1823 = vperm.slane %v1821, 0
      %v1825 = vadd.f32 %v1813, %v1823
      %v1826 = vadd.f32 %v1814, %v1823
      %v1827 = vadd.f32 %v1815, %v1823
      %v1828 = vadd.f32 %v1816, %v1823
      %v1829 = vadd.f32 %v1817, %v1823
      %v1830 = vadd.f32 %v1818, %v1823
      %v1831 = vadd.f32 %v1819, %v1823
      %v1832 = vadd.f32 %v1820, %v1823
      %v1833 = vld [vmem:[%s273] sm:$0xff]
      %v1834 = vld [vmem:[%s273 + $0x10] sm:$0xff]
      %v1835 = vld [vmem:[%s273 + $0x20] sm:$0xff]
      %v1836 = vld [vmem:[%s273 + $0x30] sm:$0xff]
      %v1837 = vld [vmem:[%s273 + $0x40] sm:$0xff]
      %v1838 = vld [vmem:[%s273 + $0x50] sm:$0xff]
      %v1839 = vld [vmem:[%s273 + $0x60] sm:$0xff]
      %v1840 = vld [vmem:[%s273 + $0x70] sm:$0xff]
      %v1841 = vld [vmem:[%s5] sm:$0xf]
      %v1842 = vld [vmem:[%s6] sm:$0x1]
      %v1844 = vperm.slane %v1842, 0
      %1854 = vrot.lane.b32.xlu0 %v1833, 116
      %v1855 = vpop.permute.xlu0 %1854
      %1856 = vrot.lane.b32.xlu0 %v1834, 116
      %v1857 = vpop.permute.xlu0 %1856
      %1858 = vrot.lane.b32.xlu0 %v1835, 116
      %v1859 = vpop.permute.xlu0 %1858
      %1860 = vrot.lane.b32.xlu0 %v1836, 116
      %v1861 = vpop.permute.xlu0 %1860
      %1862 = vrot.lane.b32.xlu0 %v1837, 116
      %v1863 = vpop.permute.xlu0 %1862
      %1864 = vrot.lane.b32.xlu0 %v1838, 116
      %v1865 = vpop.permute.xlu0 %1864
      %1866 = vrot.lane.b32.xlu0 %v1839, 116
      %v1867 = vpop.permute.xlu0 %1866
      %1868 = vrot.lane.b32.xlu0 %v1840, 116
      %v1869 = vpop.permute.xlu0 %1868
      %v1870 = vsel %vm314, %v1855, 0
      %v1872 = vsel %vm314, %v1857, 0
      %v1874 = vsel %vm314, %v1859, 0
      %v1876 = vsel %vm314, %v1861, 0
      %v1878 = vsel %vm314, %v1863, 0
      %v1880 = vsel %vm314, %v1865, 0
      %v1882 = vsel %vm314, %v1867, 0
      %v1884 = vsel %vm314, %v1869, 0
      %v1887 = vsel %vm331, %v1841, 0
      %1889 = vmatpush.msra.mxu0 0.0
      %1890 = vmatpush.msra.mxu0 0.0
      %1891 = vmatpush.msra.mxu0 0.0
      %1892 = vmatpush.msra.mxu0 0.0
      %1893 = vmatpush.msra.mxu0 0.0
      %1894 = vmatpush.msra.mxu0 0.0
      %1895 = vmatpush.msra.mxu0 0.0
      %1896 = vmatpush.msra.mxu0 0.0
      %1897 = vmatpush.msra.mxu0 0.0
      %1898 = vmatpush.msra.mxu0 0.0
      %1899 = vmatpush.msra.mxu0 0.0
      %1900 = vmatpush.msra.mxu0 0.0
      %1901 = vmatpush.msra.mxu0 0.0
      %1902 = vmatpush.msra.mxu0 0.0
      %1903 = vmatpush.msra.mxu0 0.0
      %1904 = vmatpush.msra.mxu0 %v1887
      %1905 = vmatmul.f32.gmra.mxu0 %v1870
      %v1906 = vpop.f32.mrf.mxu0
      %v1907 = vadd.f32 %v1844, %v1906
      %1908 = vmatmul.f32.gmra.mxu0 %v1872
      %v1909 = vpop.f32.mrf.mxu0
      %v1910 = vadd.f32 %v1844, %v1909
      %1911 = vmatmul.f32.gmra.mxu0 %v1874
      %v1912 = vpop.f32.mrf.mxu0
      %v1913 = vadd.f32 %v1844, %v1912
      %1914 = vmatmul.f32.gmra.mxu0 %v1876
      %v1915 = vpop.f32.mrf.mxu0
      %v1916 = vadd.f32 %v1844, %v1915
      %1917 = vmatmul.f32.gmra.mxu0 %v1878
      %v1918 = vpop.f32.mrf.mxu0
      %v1919 = vadd.f32 %v1844, %v1918
      %1920 = vmatmul.f32.gmra.mxu0 %v1880
      %v1921 = vpop.f32.mrf.mxu0
      %v1922 = vadd.f32 %v1844, %v1921
      %1923 = vmatmul.f32.gmra.mxu0 %v1882
      %v1924 = vpop.f32.mrf.mxu0
      %v1925 = vadd.f32 %v1844, %v1924
      %1926 = vmatmul.f32.gmra.mxu0 %v1884
      %v1927 = vpop.f32.mrf.mxu0
      %v1928 = vadd.f32 %v1844, %v1927
      %1929 = vdwg.mxu0
      %v1930 = vadd.f32 %v1825, %v1907
      %v1931 = vadd.f32 %v1826, %v1910
      %v1932 = vadd.f32 %v1827, %v1913
      %v1933 = vadd.f32 %v1828, %v1916
      %v1934 = vadd.f32 %v1829, %v1919
      %v1935 = vadd.f32 %v1830, %v1922
      %v1936 = vadd.f32 %v1831, %v1925
      %v1937 = vadd.f32 %v1832, %v1928
      %v1938 = vmax.f32 %v1930, 0.0
      %v1939 = vmax.f32 %v1931, 0.0
      %v1940 = vmax.f32 %v1932, 0.0
      %v1941 = vmax.f32 %v1933, 0.0
      %v1942 = vmax.f32 %v1934, 0.0
      %v1943 = vmax.f32 %v1935, 0.0
      %v1944 = vmax.f32 %v1936, 0.0
      %v1945 = vmax.f32 %v1937, 0.0
      %1946 = vst.msk [vmem:[%s278] sm:$0xff] %vm1059, %v1938
      %1947 = vst.msk [vmem:[%s278 + $0x8] sm:$0xff] %vm1059, %v1939
      %1948 = vst.msk [vmem:[%s278 + $0x10] sm:$0xff] %vm1059, %v1940
      %1949 = vst.msk [vmem:[%s278 + $0x18] sm:$0xff] %vm1059, %v1941
      %1950 = vst.msk [vmem:[%s278 + $0x20] sm:$0xff] %vm1059, %v1942
      %1951 = vst.msk [vmem:[%s278 + $0x28] sm:$0xff] %vm1059, %v1943
      %1952 = vst.msk [vmem:[%s278 + $0x30] sm:$0xff] %vm1059, %v1944
      %1953 = vst.msk [vmem:[%s278 + $0x38] sm:$0xff] %vm1059, %v1945
      %p1954 = scmp.lt.s32.totalorder %s18, 1
      %s1955 = scalar_select %p1954, %s18, 1
      %s1956 = smul.addr %s1955, 8
      %s1957 = smul.addr %s1956, 8
      %s1958 = scalar_lea.vmem %s7, %s1957
      // Predicated region
      $region49: #{tpu_custom_call.1} parent=47 // pred_check
        %p1959 = pneg %p188
      $region50: #{tpu_custom_call.1} parent=47 // pred_check_branch
        %1961 = sbr.rel (%p1959) target = $region52
      $region51: #{tpu_custom_call.1} parent=47 // pred_region
        _
      $region52: #{tpu_custom_call.1} parent=47 // pred_fallthru
        _
    $region48: #{tpu_custom_call.1} parent=5 // pred_fallthru
      _
    %p1962 = scmp.le.s32.totalorder 2, %s13
    // Predicated region
    $region53: #{tpu_custom_call.1} parent=5 // pred_check
      %p1963 = pneg %p1962
    $region54: #{tpu_custom_call.1} parent=5 // pred_check_branch
      %1965 = sbr.rel (%p1963) target = $region56
    $region55: #{tpu_custom_call.1} parent=5 // pred_region
      %s1966 = ssub.s32 %s13, 2
      // Predicated region
      $region57: #{tpu_custom_call.1} parent=55 // pred_check
        %p1967 = pneg %p194
      $region58: #{tpu_custom_call.1} parent=55 // pred_check_branch
        %1969 = sbr.rel (%p1967) target = $region60
      $region59: #{tpu_custom_call.1} parent=55 // pred_region
        %p1970 = scmp.lt.s32.totalorder %s19, 1
        %s1971 = scalar_select %p1970, %s19, 1
        %s1972 = smul.addr %s1971, 8
        %s1973 = smul.addr %s1972, 8
        %s1974 = scalar_lea.vmem %s7, %s1973
      $region60: #{tpu_custom_call.1} parent=55 // pred_fallthru
        _
    $region56: #{tpu_custom_call.1} parent=5 // pred_fallthru
      _
  $region6: #{tpu_custom_call.1} parent=0 // loop_footer
    %s17 = sadd.s32 1, %s13
  $region7: #{tpu_custom_call.1} parent=0 // loop_footer_branch
    %12 = sbr.rel target = $region3
  $region8: #{tpu_custom_call.1} parent=0 // loop_exit
    _

</llo_original>
